<compile_context>
chip_gen: v7x
topology: tpu7x:2x2x1
jax: 0.10.0
libtpu: 0.0.40
codegen_flags: <defaults>
</compile_context>

<pallas_src>
import jax
import jax.numpy as jnp
from jax.experimental import pallas as pl
from jax.experimental.pallas import tpu as pltpu

N_PAD = 128    # lane-dense padded output-feature dimension
SUBLANE = 16   # bf16 sublane packing -> (16, 128) native tiles


def _round_up(n, m):
    return ((n + m - 1) // m) * m


def _linear_kernel(x_ref, w_ref, b_ref, o_ref):
    # x_ref: (TM, K) bf16   w_ref: (K, N_PAD) bf16
    # b_ref: (1, N_PAD) f32 o_ref: (TM, N_PAD) f32
    acc = jnp.dot(x_ref[...], w_ref[...], preferred_element_type=jnp.float32)
    o_ref[...] = acc + b_ref[...]


def prepare_linear_params(weight, bias):
    """One-time (init-time) parameter prep, hoisted out of the forward pass.

    weight: (10, 3072) f32, bias: (10,) f32
    -> w_kn: (3072, 128) bf16 (transposed + zero-padded), b_pad: (1, 128) f32.
    """
    out_features, in_features = weight.shape
    w_kn = jnp.pad(weight.T, ((0, 0), (0, N_PAD - out_features)))
    w_kn = w_kn.astype(jnp.bfloat16)
    b_pad = jnp.pad(bias, (0, N_PAD - out_features)).reshape(1, N_PAD)
    b_pad = b_pad.astype(jnp.float32)
    return w_kn, b_pad


def dummy_model_forward(x, w_kn, b_pad, out_features=10, *, tm=512):
    """x: (B, 3, 32, 32) f32 -> (B, 10) f32 (== Flatten + Linear(3072, 10))."""
    B = x.shape[0]
    in_features = w_kn.shape[0]  # 3072

    # nn.Flatten (row-major C*H*W), then bf16 cast (halves HBM read traffic).
    x_flat = x.reshape(B, in_features).astype(jnp.bfloat16)

    # Batch tile: <= tm rows, a multiple of the bf16 sublane count, small
    # enough that large batches produce >=2 grid steps (v7x megacore sharding).
    b_sub = _round_up(max(B, SUBLANE), SUBLANE)
    tm_eff = min(tm, _round_up(pl.cdiv(b_sub, 2), SUBLANE))
    tm_eff = max(SUBLANE, min(tm_eff, b_sub))

    # Zero-pad the batch to a whole number of full tiles: every load/store is
    # a full, unmasked (16,128) tile and no out-of-bounds rows are touched.
    B_pad = _round_up(b_sub, tm_eff)
    if B_pad != B:
        x_flat = jnp.pad(x_flat, ((0, B_pad - B), (0, 0)))
    grid = (B_pad // tm_eff,)

    cost = pl.CostEstimate(
        flops=2 * B_pad * in_features * N_PAD,
        transcendentals=0,
        bytes_accessed=(B_pad * in_features * 2      # x, bf16
                        + in_features * N_PAD * 2    # weight, read once
                        + N_PAD * 4                  # bias
                        + B_pad * N_PAD * 4),        # output, f32
    )

    out_padded = pl.pallas_call(
        _linear_kernel,
        out_shape=jax.ShapeDtypeStruct((B_pad, N_PAD), jnp.float32),
        grid_spec=pltpu.PrefetchScalarGridSpec(
            num_scalar_prefetch=0,
            grid=grid,
            in_specs=[
                pl.BlockSpec((tm_eff, in_features), lambda i: (i, 0)),
                pl.BlockSpec((in_features, N_PAD), lambda i: (0, 0)),
                pl.BlockSpec((1, N_PAD), lambda i: (0, 0)),
            ],
            out_specs=pl.BlockSpec((tm_eff, N_PAD), lambda i: (i, 0)),
        ),
        compiler_params=pltpu.CompilerParams(
            dimension_semantics=("parallel",),
            vmem_limit_bytes=48 * 1024 * 1024,   # safe under v7x 64 MiB VMEM
        ),
        cost_estimate=cost,
    )(x_flat, w_kn, b_pad)

    # Drop the batch padding and the padded output lanes -> (B, 10).
    return out_padded[:B, :out_features]


if __name__ == "__main__":
    key = jax.random.PRNGKey(0)
    k_x, k_w, k_b = jax.random.split(key, 3)

    B, C, H, W = 2, 3, 32, 32
    in_features = C * H * W      # 3072
    out_features = 10

    # Deterministic init mimicking nn.Linear default (uniform +-1/sqrt(fan_in)).
    bound = 1.0 / jnp.sqrt(jnp.float32(in_features))
    weight = jax.random.uniform(k_w, (out_features, in_features),
                                minval=-bound, maxval=bound, dtype=jnp.float32)
    bias = jax.random.uniform(k_b, (out_features,),
                              minval=-bound, maxval=bound, dtype=jnp.float32)
    x = jax.random.normal(k_x, (B, C, H, W), dtype=jnp.float32)

    # Init-time (hoisted) parameter prep: transpose, pad, bf16 cast.
    w_kn, b_pad = prepare_linear_params(weight, bias)

    out = dummy_model_forward(x, w_kn, b_pad, out_features)
    out = jax.block_until_ready(out)

    # Reference with the same bf16 input rounding and f32 accumulation.
    x_bf = x.reshape(B, in_features).astype(jnp.bfloat16).astype(jnp.float32)
    w_bf = weight.astype(jnp.bfloat16).astype(jnp.float32)
    ref = x_bf @ w_bf.T + bias

    assert out.shape == (B, out_features)
    assert jnp.allclose(out, ref, atol=5e-3, rtol=5e-3), (
        "max abs err = %f" % float(jnp.max(jnp.abs(out - ref))))

    print("KERNEL_OK")
</pallas_src>

<mosaic_0001>
module attributes {stable_mosaic.version = 11 : i64} {
  func.func @_linear_kernel(%arg0: i32, %arg1: memref<16x3072xbf16, #tpu.memory_space<vmem>>, %arg2: memref<3072x128xbf16, #tpu.memory_space<vmem>>, %arg3: memref<1x128xf32, #tpu.memory_space<vmem>>, %arg4: memref<16x128xf32, #tpu.memory_space<vmem>>) attributes {dimension_semantics = [#tpu.dimension_semantics<parallel>], iteration_bounds = array<i64: 1>, scalar_prefetch = 0 : i64, scratch_operands = 0 : i64, tpu.core_type = #tpu.core_type<tc>, window_params = [{transform_indices = @transform_0, window_bounds = array<i64: 16, 3072>}, {pipeline_mode = #tpu.pipeline_mode<synchronous>, transform_indices = @transform_1, window_bounds = array<i64: 3072, 128>}, {pipeline_mode = #tpu.pipeline_mode<synchronous>, transform_indices = @transform_2, window_bounds = array<i64: 1, 128>}, {transform_indices = @transform_3, window_bounds = array<i64: 16, 128>}]} {
    %c0 = arith.constant 0 : index
    %c0_0 = arith.constant 0 : index
    %0 = vector.load %arg1[%c0, %c0_0] : memref<16x3072xbf16, #tpu.memory_space<vmem>>, vector<16x3072xbf16>
    %c0_1 = arith.constant 0 : index
    %c0_2 = arith.constant 0 : index
    %1 = vector.load %arg2[%c0_1, %c0_2] : memref<3072x128xbf16, #tpu.memory_space<vmem>>, vector<3072x128xbf16>
    %cst = arith.constant dense<0.000000e+00> : vector<16x128xf32>
    %2 = tpu.matmul %0, %1, %cst {dimension_numbers = #tpu.dot_dimension_numbers<[1], [0], [0], [1], [0, 0, 1, 1], [], []>} : vector<16x3072xbf16>, vector<3072x128xbf16>, vector<16x128xf32> -> vector<16x128xf32>
    %c0_3 = arith.constant 0 : index
    %c0_4 = arith.constant 0 : index
    %3 = vector.load %arg3[%c0_3, %c0_4] : memref<1x128xf32, #tpu.memory_space<vmem>>, vector<1x128xf32>
    %4 = vector.broadcast %3 : vector<1x128xf32> to vector<16x128xf32>
    %5 = arith.addf %2, %4 : vector<16x128xf32>
    %c0_5 = arith.constant 0 : index
    %c0_6 = arith.constant 0 : index
    %6 = vector.load %arg4[%c0_5, %c0_6] : memref<16x128xf32, #tpu.memory_space<vmem>>, vector<16x128xf32>
    tpu.vector_store %arg4[%c0_5, %c0_6], %5 {strides = array<i32>} : memref<16x128xf32, #tpu.memory_space<vmem>>, vector<16x128xf32>,
    return
  }
  func.func @transform_0(%arg0: i32) -> (i32, i32) {
    %c0_i32 = arith.constant 0 : i32
    %c0_i32_0 = arith.constant 0 : i32
    return %arg0, %c0_i32 : i32, i32
  }
  func.func @transform_1(%arg0: i32) -> (i32, i32) {
    %c0_i32 = arith.constant 0 : i32
    %c0_i32_0 = arith.constant 0 : i32
    %c0_i32_1 = arith.constant 0 : i32
    return %c0_i32, %c0_i32_0 : i32, i32
  }
  func.func @transform_2(%arg0: i32) -> (i32, i32) {
    %c0_i32 = arith.constant 0 : i32
    %c0_i32_0 = arith.constant 0 : i32
    %c0_i32_1 = arith.constant 0 : i32
    return %c0_i32, %c0_i32_0 : i32, i32
  }
  func.func @transform_3(%arg0: i32) -> (i32, i32) {
    %c0_i32 = arith.constant 0 : i32
    %c0_i32_0 = arith.constant 0 : i32
    return %arg0, %c0_i32 : i32, i32
  }
}

</mosaic_0001>

<llo_original>
// kernel: tpu_custom_call.1
$region0: #{tpu_custom_call.1}
  #allocation0 [shape = 'u32[]', space=smem, size = 0x4, offset = 0x4, fixed_abs, tag = 'smem constant byte address 0x4 - core index']
  #allocation1 [shape = 'u32[144,128]{1,0:T(1,128)}', space=vmem, size = 0x12000, scoped, tag = 'internal scratch']
  %s0 = inlined_call_operand.hbm [shape: bf16[16,3072], index: 0, kind: input, shape index: {}]
  %s1 = inlined_call_operand.hbm [shape: bf16[3072,128], index: 1, kind: input, shape index: {}]
  %s2 = inlined_call_operand.vmem [shape: f32[1,128], index: 2, kind: input, shape index: {}]
  %s3 = inlined_call_operand.hbm [shape: f32[16,128], index: 3, kind: output, shape index: {}]
  %s4 = sld [smem:[#allocation0]]
  $region30: #{tpu_custom_call.1} parent=0
    _
  %s6 = ssub.s32 1, %s4
  %s7 = scalar_select 0, %s6, %s4
  $region1: #{tpu_custom_call.1} parent=0
    #allocation2 [shape = 'u8[98304]{0}', space=vmem, size = 0x18000, scoped, tag = 'input window, operand 0, single buffered']
    #allocation3 [shape = 's32[1]{0}', space=sflag, size = 0x4, scoped, tag = 'scoped memory for tpu_custom_call.1']
    #allocation4 [shape = 's32[1]{0}', space=sflag, size = 0x4, scoped, tag = 'scoped memory for tpu_custom_call.1']
    #allocation5 [shape = 'u8[786432]{0}', space=vmem, size = 0xc0000, scoped, tag = 'input window, operand 1, single buffered']
    #allocation6 [shape = 's32[1]{0}', space=sflag, size = 0x4, scoped, tag = 'scoped memory for tpu_custom_call.1']
    #allocation7 [shape = 'u8[8192]{0}', space=vmem, size = 0x2000, scoped, tag = 'output window, operand 0, single buffered']
    %8 = vsyncpa [#allocation3], 0
    %9 = vsyncpa [#allocation6], 0
    %10 = vsyncpa [#allocation4], 0
    // Predicated region
    $region2: #{tpu_custom_call.1} parent=1 // pred_check
      _
    $region3: #{tpu_custom_call.1} parent=1 // pred_check_branch
      %12 = sbr.rel (0) target = $region5
    $region4: #{tpu_custom_call.1} parent=1 // pred_region
      %s14 = ssub.s32 3072, 3072
      %15 = vsyncadd [#allocation3], %s14
      %s16 = sshll.u32 [#allocation2], 4
      %s17 = int_to_ptr.vmem [resolvable:$true] %s16
      %22 = dma.hbm_to_vmem [thread:$0]  %s0, 3072, %s17, [#allocation3], 1536, 1536, 96
    $region5: #{tpu_custom_call.1} parent=1 // pred_fallthru
      _
    // Predicated region
    $region6: #{tpu_custom_call.1} parent=1 // pred_check
      _
    $region7: #{tpu_custom_call.1} parent=1 // pred_check_branch
      %24 = sbr.rel (0) target = $region9
    $region8: #{tpu_custom_call.1} parent=1 // pred_region
      %s26 = ssub.s32 24576, 24576
      %27 = vsyncadd [#allocation6], %s26
      %s28 = sshll.u32 [#allocation5], 4
      %s29 = int_to_ptr.vmem [resolvable:$true] %s28
      %34 = dma.hbm_to_vmem [thread:$0]  %s1, 24576, %s29, [#allocation6], 64, 64, 4
    $region9: #{tpu_custom_call.1} parent=1 // pred_fallthru
      _
    // Predicated region
    $region10: #{tpu_custom_call.1} parent=1 // pred_check
      _
    $region11: #{tpu_custom_call.1} parent=1 // pred_check_branch
      %36 = sbr.rel (0) target = $region13
    $region12: #{tpu_custom_call.1} parent=1 // pred_region
      _
    $region13: #{tpu_custom_call.1} parent=1 // pred_fallthru
      _
    // Predicated region
    $region14: #{tpu_custom_call.1} parent=1 // pred_check
      _
    $region15: #{tpu_custom_call.1} parent=1 // pred_check_branch
      %38 = sbr.rel (0) target = $region17
    $region16: #{tpu_custom_call.1} parent=1 // pred_region
      %39 = dma.done [#allocation3], 3072
    $region17: #{tpu_custom_call.1} parent=1 // pred_fallthru
      _
    // Predicated region
    $region18: #{tpu_custom_call.1} parent=1 // pred_check
      _
    $region19: #{tpu_custom_call.1} parent=1 // pred_check_branch
      %41 = sbr.rel (0) target = $region21
    $region20: #{tpu_custom_call.1} parent=1 // pred_region
      %42 = dma.done [#allocation6], 24576
    $region21: #{tpu_custom_call.1} parent=1 // pred_fallthru
      _
    %v44 = vld [vmem:[#allocation2] sm:$0xff]
    %v45 = vld [vmem:[#allocation2 + $0x8] sm:$0xff]
    %v46 = vld [vmem:[#allocation2 + $0x10] sm:$0xff]
    %v47 = vld [vmem:[#allocation2 + $0x18] sm:$0xff]
    %v48 = vld [vmem:[#allocation2 + $0x20] sm:$0xff]
    %v49 = vld [vmem:[#allocation2 + $0x28] sm:$0xff]
    %v50 = vld [vmem:[#allocation2 + $0x30] sm:$0xff]
    %v51 = vld [vmem:[#allocation2 + $0x38] sm:$0xff]
    %v52 = vld [vmem:[#allocation2 + $0x40] sm:$0xff]
    %v53 = vld [vmem:[#allocation2 + $0x48] sm:$0xff]
    %v54 = vld [vmem:[#allocation2 + $0x50] sm:$0xff]
    %v55 = vld [vmem:[#allocation2 + $0x58] sm:$0xff]
    %v56 = vld [vmem:[#allocation2 + $0x60] sm:$0xff]
    %v57 = vld [vmem:[#allocation2 + $0x68] sm:$0xff]
    %v58 = vld [vmem:[#allocation2 + $0x70] sm:$0xff]
    %v59 = vld [vmem:[#allocation2 + $0x78] sm:$0xff]
    %v60 = vld [vmem:[#allocation2 + $0x80] sm:$0xff]
    %v61 = vld [vmem:[#allocation2 + $0x88] sm:$0xff]
    %v62 = vld [vmem:[#allocation2 + $0x90] sm:$0xff]
    %v63 = vld [vmem:[#allocation2 + $0x98] sm:$0xff]
    %v64 = vld [vmem:[#allocation2 + $0xa0] sm:$0xff]
    %v65 = vld [vmem:[#allocation2 + $0xa8] sm:$0xff]
    %v66 = vld [vmem:[#allocation2 + $0xb0] sm:$0xff]
    %v67 = vld [vmem:[#allocation2 + $0xb8] sm:$0xff]
    %v68 = vld [vmem:[#allocation5] sm:$0xf]
    %v69 = vld [vmem:[#allocation5 + $0x4] sm:$0xf]
    %v70 = vld [vmem:[#allocation5 + $0x8] sm:$0xf]
    %v71 = vld [vmem:[#allocation5 + $0xc] sm:$0xf]
    %v72 = vld [vmem:[#allocation5 + $0x10] sm:$0xf]
    %v73 = vld [vmem:[#allocation5 + $0x14] sm:$0xf]
    %v74 = vld [vmem:[#allocation5 + $0x18] sm:$0xf]
    %v75 = vld [vmem:[#allocation5 + $0x1c] sm:$0xf]
    %v76 = vld [vmem:[#allocation5 + $0x20] sm:$0xf]
    %v77 = vld [vmem:[#allocation5 + $0x24] sm:$0xf]
    %v78 = vld [vmem:[#allocation5 + $0x28] sm:$0xf]
    %v79 = vld [vmem:[#allocation5 + $0x2c] sm:$0xf]
    %v80 = vld [vmem:[#allocation5 + $0x30] sm:$0xf]
    %v81 = vld [vmem:[#allocation5 + $0x34] sm:$0xf]
    %v82 = vld [vmem:[#allocation5 + $0x38] sm:$0xf]
    %v83 = vld [vmem:[#allocation5 + $0x3c] sm:$0xf]
    %v84 = vld [vmem:[#allocation5 + $0x40] sm:$0xf]
    %v85 = vld [vmem:[#allocation5 + $0x44] sm:$0xf]
    %v86 = vld [vmem:[#allocation5 + $0x48] sm:$0xf]
    %v87 = vld [vmem:[#allocation5 + $0x4c] sm:$0xf]
    %v88 = vld [vmem:[#allocation5 + $0x50] sm:$0xf]
    %v89 = vld [vmem:[#allocation5 + $0x54] sm:$0xf]
    %v90 = vld [vmem:[#allocation5 + $0x58] sm:$0xf]
    %v91 = vld [vmem:[#allocation5 + $0x5c] sm:$0xf]
    %v92 = vld [vmem:[#allocation5 + $0x60] sm:$0xf]
    %v93 = vld [vmem:[#allocation5 + $0x64] sm:$0xf]
    %v94 = vld [vmem:[#allocation5 + $0x68] sm:$0xf]
    %v95 = vld [vmem:[#allocation5 + $0x6c] sm:$0xf]
    %v96 = vld [vmem:[#allocation5 + $0x70] sm:$0xf]
    %v97 = vld [vmem:[#allocation5 + $0x74] sm:$0xf]
    %v98 = vld [vmem:[#allocation5 + $0x78] sm:$0xf]
    %v99 = vld [vmem:[#allocation5 + $0x7c] sm:$0xf]
    %v100 = vld [vmem:[#allocation5 + $0x80] sm:$0xf]
    %v101 = vld [vmem:[#allocation5 + $0x84] sm:$0xf]
    %v102 = vld [vmem:[#allocation5 + $0x88] sm:$0xf]
    %v103 = vld [vmem:[#allocation5 + $0x8c] sm:$0xf]
    %v104 = vld [vmem:[#allocation5 + $0x90] sm:$0xf]
    %v105 = vld [vmem:[#allocation5 + $0x94] sm:$0xf]
    %v106 = vld [vmem:[#allocation5 + $0x98] sm:$0xf]
    %v107 = vld [vmem:[#allocation5 + $0x9c] sm:$0xf]
    %v108 = vld [vmem:[#allocation5 + $0xa0] sm:$0xf]
    %v109 = vld [vmem:[#allocation5 + $0xa4] sm:$0xf]
    %v110 = vld [vmem:[#allocation5 + $0xa8] sm:$0xf]
    %v111 = vld [vmem:[#allocation5 + $0xac] sm:$0xf]
    %v112 = vld [vmem:[#allocation5 + $0xb0] sm:$0xf]
    %v113 = vld [vmem:[#allocation5 + $0xb4] sm:$0xf]
    %v114 = vld [vmem:[#allocation5 + $0xb8] sm:$0xf]
    %v115 = vld [vmem:[#allocation5 + $0xbc] sm:$0xf]
    %v116 = vld [vmem:[#allocation5 + $0xc0] sm:$0xf]
    %v117 = vld [vmem:[#allocation5 + $0xc4] sm:$0xf]
    %v118 = vld [vmem:[#allocation5 + $0xc8] sm:$0xf]
    %v119 = vld [vmem:[#allocation5 + $0xcc] sm:$0xf]
    %v120 = vld [vmem:[#allocation5 + $0xd0] sm:$0xf]
    %v121 = vld [vmem:[#allocation5 + $0xd4] sm:$0xf]
    %v122 = vld [vmem:[#allocation5 + $0xd8] sm:$0xf]
    %v123 = vld [vmem:[#allocation5 + $0xdc] sm:$0xf]
    %v124 = vld [vmem:[#allocation5 + $0xe0] sm:$0xf]
    %v125 = vld [vmem:[#allocation5 + $0xe4] sm:$0xf]
    %v126 = vld [vmem:[#allocation5 + $0xe8] sm:$0xf]
    %v127 = vld [vmem:[#allocation5 + $0xec] sm:$0xf]
    %v128 = vld [vmem:[#allocation5 + $0xf0] sm:$0xf]
    %v129 = vld [vmem:[#allocation5 + $0xf4] sm:$0xf]
    %v130 = vld [vmem:[#allocation5 + $0xf8] sm:$0xf]
    %v131 = vld [vmem:[#allocation5 + $0xfc] sm:$0xf]
    %v132 = vld [vmem:[#allocation5 + $0x100] sm:$0xf]
    %v133 = vld [vmem:[#allocation5 + $0x104] sm:$0xf]
    %v134 = vld [vmem:[#allocation5 + $0x108] sm:$0xf]
    %v135 = vld [vmem:[#allocation5 + $0x10c] sm:$0xf]
    %v136 = vld [vmem:[#allocation5 + $0x110] sm:$0xf]
    %v137 = vld [vmem:[#allocation5 + $0x114] sm:$0xf]
    %v138 = vld [vmem:[#allocation5 + $0x118] sm:$0xf]
    %v139 = vld [vmem:[#allocation5 + $0x11c] sm:$0xf]
    %v140 = vld [vmem:[#allocation5 + $0x120] sm:$0xf]
    %v141 = vld [vmem:[#allocation5 + $0x124] sm:$0xf]
    %v142 = vld [vmem:[#allocation5 + $0x128] sm:$0xf]
    %v143 = vld [vmem:[#allocation5 + $0x12c] sm:$0xf]
    %v144 = vld [vmem:[#allocation5 + $0x130] sm:$0xf]
    %v145 = vld [vmem:[#allocation5 + $0x134] sm:$0xf]
    %v146 = vld [vmem:[#allocation5 + $0x138] sm:$0xf]
    %v147 = vld [vmem:[#allocation5 + $0x13c] sm:$0xf]
    %v148 = vld [vmem:[#allocation5 + $0x140] sm:$0xf]
    %v149 = vld [vmem:[#allocation5 + $0x144] sm:$0xf]
    %v150 = vld [vmem:[#allocation5 + $0x148] sm:$0xf]
    %v151 = vld [vmem:[#allocation5 + $0x14c] sm:$0xf]
    %v152 = vld [vmem:[#allocation5 + $0x150] sm:$0xf]
    %v153 = vld [vmem:[#allocation5 + $0x154] sm:$0xf]
    %v154 = vld [vmem:[#allocation5 + $0x158] sm:$0xf]
    %v155 = vld [vmem:[#allocation5 + $0x15c] sm:$0xf]
    %v156 = vld [vmem:[#allocation5 + $0x160] sm:$0xf]
    %v157 = vld [vmem:[#allocation5 + $0x164] sm:$0xf]
    %v158 = vld [vmem:[#allocation5 + $0x168] sm:$0xf]
    %v159 = vld [vmem:[#allocation5 + $0x16c] sm:$0xf]
    %v160 = vld [vmem:[#allocation5 + $0x170] sm:$0xf]
    %v161 = vld [vmem:[#allocation5 + $0x174] sm:$0xf]
    %v162 = vld [vmem:[#allocation5 + $0x178] sm:$0xf]
    %v163 = vld [vmem:[#allocation5 + $0x17c] sm:$0xf]
    %v164 = vld [vmem:[#allocation5 + $0x180] sm:$0xf]
    %v165 = vld [vmem:[#allocation5 + $0x184] sm:$0xf]
    %v166 = vld [vmem:[#allocation5 + $0x188] sm:$0xf]
    %v167 = vld [vmem:[#allocation5 + $0x18c] sm:$0xf]
    %v168 = vld [vmem:[#allocation5 + $0x190] sm:$0xf]
    %v169 = vld [vmem:[#allocation5 + $0x194] sm:$0xf]
    %v170 = vld [vmem:[#allocation5 + $0x198] sm:$0xf]
    %v171 = vld [vmem:[#allocation5 + $0x19c] sm:$0xf]
    %v172 = vld [vmem:[#allocation5 + $0x1a0] sm:$0xf]
    %v173 = vld [vmem:[#allocation5 + $0x1a4] sm:$0xf]
    %v174 = vld [vmem:[#allocation5 + $0x1a8] sm:$0xf]
    %v175 = vld [vmem:[#allocation5 + $0x1ac] sm:$0xf]
    %v176 = vld [vmem:[#allocation5 + $0x1b0] sm:$0xf]
    %v177 = vld [vmem:[#allocation5 + $0x1b4] sm:$0xf]
    %v178 = vld [vmem:[#allocation5 + $0x1b8] sm:$0xf]
    %v179 = vld [vmem:[#allocation5 + $0x1bc] sm:$0xf]
    %v180 = vld [vmem:[#allocation5 + $0x1c0] sm:$0xf]
    %v181 = vld [vmem:[#allocation5 + $0x1c4] sm:$0xf]
    %v182 = vld [vmem:[#allocation5 + $0x1c8] sm:$0xf]
    %v183 = vld [vmem:[#allocation5 + $0x1cc] sm:$0xf]
    %v184 = vld [vmem:[#allocation5 + $0x1d0] sm:$0xf]
    %v185 = vld [vmem:[#allocation5 + $0x1d4] sm:$0xf]
    %v186 = vld [vmem:[#allocation5 + $0x1d8] sm:$0xf]
    %v187 = vld [vmem:[#allocation5 + $0x1dc] sm:$0xf]
    %v188 = vld [vmem:[#allocation5 + $0x1e0] sm:$0xf]
    %v189 = vld [vmem:[#allocation5 + $0x1e4] sm:$0xf]
    %v190 = vld [vmem:[#allocation5 + $0x1e8] sm:$0xf]
    %v191 = vld [vmem:[#allocation5 + $0x1ec] sm:$0xf]
    %v192 = vld [vmem:[#allocation5 + $0x1f0] sm:$0xf]
    %v193 = vld [vmem:[#allocation5 + $0x1f4] sm:$0xf]
    %v194 = vld [vmem:[#allocation5 + $0x1f8] sm:$0xf]
    %v195 = vld [vmem:[#allocation5 + $0x1fc] sm:$0xf]
    %v196 = vld [vmem:[#allocation5 + $0x200] sm:$0xf]
    %v197 = vld [vmem:[#allocation5 + $0x204] sm:$0xf]
    %v198 = vld [vmem:[#allocation5 + $0x208] sm:$0xf]
    %v199 = vld [vmem:[#allocation5 + $0x20c] sm:$0xf]
    %v200 = vld [vmem:[#allocation5 + $0x210] sm:$0xf]
    %v201 = vld [vmem:[#allocation5 + $0x214] sm:$0xf]
    %v202 = vld [vmem:[#allocation5 + $0x218] sm:$0xf]
    %v203 = vld [vmem:[#allocation5 + $0x21c] sm:$0xf]
    %v204 = vld [vmem:[#allocation5 + $0x220] sm:$0xf]
    %v205 = vld [vmem:[#allocation5 + $0x224] sm:$0xf]
    %v206 = vld [vmem:[#allocation5 + $0x228] sm:$0xf]
    %v207 = vld [vmem:[#allocation5 + $0x22c] sm:$0xf]
    %v208 = vld [vmem:[#allocation5 + $0x230] sm:$0xf]
    %v209 = vld [vmem:[#allocation5 + $0x234] sm:$0xf]
    %v210 = vld [vmem:[#allocation5 + $0x238] sm:$0xf]
    %v211 = vld [vmem:[#allocation5 + $0x23c] sm:$0xf]
    %v212 = vld [vmem:[#allocation5 + $0x240] sm:$0xf]
    %v213 = vld [vmem:[#allocation5 + $0x244] sm:$0xf]
    %v214 = vld [vmem:[#allocation5 + $0x248] sm:$0xf]
    %v215 = vld [vmem:[#allocation5 + $0x24c] sm:$0xf]
    %v216 = vld [vmem:[#allocation5 + $0x250] sm:$0xf]
    %v217 = vld [vmem:[#allocation5 + $0x254] sm:$0xf]
    %v218 = vld [vmem:[#allocation5 + $0x258] sm:$0xf]
    %v219 = vld [vmem:[#allocation5 + $0x25c] sm:$0xf]
    %v220 = vld [vmem:[#allocation5 + $0x260] sm:$0xf]
    %v221 = vld [vmem:[#allocation5 + $0x264] sm:$0xf]
    %v222 = vld [vmem:[#allocation5 + $0x268] sm:$0xf]
    %v223 = vld [vmem:[#allocation5 + $0x26c] sm:$0xf]
    %v224 = vld [vmem:[#allocation5 + $0x270] sm:$0xf]
    %v225 = vld [vmem:[#allocation5 + $0x274] sm:$0xf]
    %v226 = vld [vmem:[#allocation5 + $0x278] sm:$0xf]
    %v227 = vld [vmem:[#allocation5 + $0x27c] sm:$0xf]
    %v228 = vld [vmem:[#allocation5 + $0x280] sm:$0xf]
    %v229 = vld [vmem:[#allocation5 + $0x284] sm:$0xf]
    %v230 = vld [vmem:[#allocation5 + $0x288] sm:$0xf]
    %v231 = vld [vmem:[#allocation5 + $0x28c] sm:$0xf]
    %v232 = vld [vmem:[#allocation5 + $0x290] sm:$0xf]
    %v233 = vld [vmem:[#allocation5 + $0x294] sm:$0xf]
    %v234 = vld [vmem:[#allocation5 + $0x298] sm:$0xf]
    %v235 = vld [vmem:[#allocation5 + $0x29c] sm:$0xf]
    %v236 = vld [vmem:[#allocation5 + $0x2a0] sm:$0xf]
    %v237 = vld [vmem:[#allocation5 + $0x2a4] sm:$0xf]
    %v238 = vld [vmem:[#allocation5 + $0x2a8] sm:$0xf]
    %v239 = vld [vmem:[#allocation5 + $0x2ac] sm:$0xf]
    %v240 = vld [vmem:[#allocation5 + $0x2b0] sm:$0xf]
    %v241 = vld [vmem:[#allocation5 + $0x2b4] sm:$0xf]
    %v242 = vld [vmem:[#allocation5 + $0x2b8] sm:$0xf]
    %v243 = vld [vmem:[#allocation5 + $0x2bc] sm:$0xf]
    %v244 = vld [vmem:[#allocation5 + $0x2c0] sm:$0xf]
    %v245 = vld [vmem:[#allocation5 + $0x2c4] sm:$0xf]
    %v246 = vld [vmem:[#allocation5 + $0x2c8] sm:$0xf]
    %v247 = vld [vmem:[#allocation5 + $0x2cc] sm:$0xf]
    %v248 = vld [vmem:[#allocation5 + $0x2d0] sm:$0xf]
    %v249 = vld [vmem:[#allocation5 + $0x2d4] sm:$0xf]
    %v250 = vld [vmem:[#allocation5 + $0x2d8] sm:$0xf]
    %v251 = vld [vmem:[#allocation5 + $0x2dc] sm:$0xf]
    %v252 = vld [vmem:[#allocation5 + $0x2e0] sm:$0xf]
    %v253 = vld [vmem:[#allocation5 + $0x2e4] sm:$0xf]
    %v254 = vld [vmem:[#allocation5 + $0x2e8] sm:$0xf]
    %v255 = vld [vmem:[#allocation5 + $0x2ec] sm:$0xf]
    %v256 = vld [vmem:[#allocation5 + $0x2f0] sm:$0xf]
    %v257 = vld [vmem:[#allocation5 + $0x2f4] sm:$0xf]
    %v258 = vld [vmem:[#allocation5 + $0x2f8] sm:$0xf]
    %v259 = vld [vmem:[#allocation5 + $0x2fc] sm:$0xf]
    %v260 = vld [vmem:[#allocation5 + $0x300] sm:$0xf]
    %v261 = vld [vmem:[#allocation5 + $0x304] sm:$0xf]
    %v262 = vld [vmem:[#allocation5 + $0x308] sm:$0xf]
    %v263 = vld [vmem:[#allocation5 + $0x30c] sm:$0xf]
    %v264 = vld [vmem:[#allocation5 + $0x310] sm:$0xf]
    %v265 = vld [vmem:[#allocation5 + $0x314] sm:$0xf]
    %v266 = vld [vmem:[#allocation5 + $0x318] sm:$0xf]
    %v267 = vld [vmem:[#allocation5 + $0x31c] sm:$0xf]
    %v268 = vld [vmem:[#allocation5 + $0x320] sm:$0xf]
    %v269 = vld [vmem:[#allocation5 + $0x324] sm:$0xf]
    %v270 = vld [vmem:[#allocation5 + $0x328] sm:$0xf]
    %v271 = vld [vmem:[#allocation5 + $0x32c] sm:$0xf]
    %v272 = vld [vmem:[#allocation5 + $0x330] sm:$0xf]
    %v273 = vld [vmem:[#allocation5 + $0x334] sm:$0xf]
    %v274 = vld [vmem:[#allocation5 + $0x338] sm:$0xf]
    %v275 = vld [vmem:[#allocation5 + $0x33c] sm:$0xf]
    %v276 = vld [vmem:[#allocation5 + $0x340] sm:$0xf]
    %v277 = vld [vmem:[#allocation5 + $0x344] sm:$0xf]
    %v278 = vld [vmem:[#allocation5 + $0x348] sm:$0xf]
    %v279 = vld [vmem:[#allocation5 + $0x34c] sm:$0xf]
    %v280 = vld [vmem:[#allocation5 + $0x350] sm:$0xf]
    %v281 = vld [vmem:[#allocation5 + $0x354] sm:$0xf]
    %v282 = vld [vmem:[#allocation5 + $0x358] sm:$0xf]
    %v283 = vld [vmem:[#allocation5 + $0x35c] sm:$0xf]
    %v284 = vld [vmem:[#allocation5 + $0x360] sm:$0xf]
    %v285 = vld [vmem:[#allocation5 + $0x364] sm:$0xf]
    %v286 = vld [vmem:[#allocation5 + $0x368] sm:$0xf]
    %v287 = vld [vmem:[#allocation5 + $0x36c] sm:$0xf]
    %v288 = vld [vmem:[#allocation5 + $0x370] sm:$0xf]
    %v289 = vld [vmem:[#allocation5 + $0x374] sm:$0xf]
    %v290 = vld [vmem:[#allocation5 + $0x378] sm:$0xf]
    %v291 = vld [vmem:[#allocation5 + $0x37c] sm:$0xf]
    %v292 = vld [vmem:[#allocation5 + $0x380] sm:$0xf]
    %v293 = vld [vmem:[#allocation5 + $0x384] sm:$0xf]
    %v294 = vld [vmem:[#allocation5 + $0x388] sm:$0xf]
    %v295 = vld [vmem:[#allocation5 + $0x38c] sm:$0xf]
    %v296 = vld [vmem:[#allocation5 + $0x390] sm:$0xf]
    %v297 = vld [vmem:[#allocation5 + $0x394] sm:$0xf]
    %v298 = vld [vmem:[#allocation5 + $0x398] sm:$0xf]
    %v299 = vld [vmem:[#allocation5 + $0x39c] sm:$0xf]
    %v300 = vld [vmem:[#allocation5 + $0x3a0] sm:$0xf]
    %v301 = vld [vmem:[#allocation5 + $0x3a4] sm:$0xf]
    %v302 = vld [vmem:[#allocation5 + $0x3a8] sm:$0xf]
    %v303 = vld [vmem:[#allocation5 + $0x3ac] sm:$0xf]
    %v304 = vld [vmem:[#allocation5 + $0x3b0] sm:$0xf]
    %v305 = vld [vmem:[#allocation5 + $0x3b4] sm:$0xf]
    %v306 = vld [vmem:[#allocation5 + $0x3b8] sm:$0xf]
    %v307 = vld [vmem:[#allocation5 + $0x3bc] sm:$0xf]
    %v308 = vld [vmem:[#allocation5 + $0x3c0] sm:$0xf]
    %v309 = vld [vmem:[#allocation5 + $0x3c4] sm:$0xf]
    %v310 = vld [vmem:[#allocation5 + $0x3c8] sm:$0xf]
    %v311 = vld [vmem:[#allocation5 + $0x3cc] sm:$0xf]
    %v312 = vld [vmem:[#allocation5 + $0x3d0] sm:$0xf]
    %v313 = vld [vmem:[#allocation5 + $0x3d4] sm:$0xf]
    %v314 = vld [vmem:[#allocation5 + $0x3d8] sm:$0xf]
    %v315 = vld [vmem:[#allocation5 + $0x3dc] sm:$0xf]
    %v316 = vld [vmem:[#allocation5 + $0x3e0] sm:$0xf]
    %v317 = vld [vmem:[#allocation5 + $0x3e4] sm:$0xf]
    %v318 = vld [vmem:[#allocation5 + $0x3e8] sm:$0xf]
    %v319 = vld [vmem:[#allocation5 + $0x3ec] sm:$0xf]
    %v320 = vld [vmem:[#allocation5 + $0x3f0] sm:$0xf]
    %v321 = vld [vmem:[#allocation5 + $0x3f4] sm:$0xf]
    %v322 = vld [vmem:[#allocation5 + $0x3f8] sm:$0xf]
    %v323 = vld [vmem:[#allocation5 + $0x3fc] sm:$0xf]
    %v324 = vld [vmem:[#allocation5 + $0x400] sm:$0xf]
    %v325 = vld [vmem:[#allocation5 + $0x404] sm:$0xf]
    %v326 = vld [vmem:[#allocation5 + $0x408] sm:$0xf]
    %v327 = vld [vmem:[#allocation5 + $0x40c] sm:$0xf]
    %v328 = vld [vmem:[#allocation5 + $0x410] sm:$0xf]
    %v329 = vld [vmem:[#allocation5 + $0x414] sm:$0xf]
    %v330 = vld [vmem:[#allocation5 + $0x418] sm:$0xf]
    %v331 = vld [vmem:[#allocation5 + $0x41c] sm:$0xf]
    %v332 = vld [vmem:[#allocation5 + $0x420] sm:$0xf]
    %v333 = vld [vmem:[#allocation5 + $0x424] sm:$0xf]
    %v334 = vld [vmem:[#allocation5 + $0x428] sm:$0xf]
    %v335 = vld [vmem:[#allocation5 + $0x42c] sm:$0xf]
    %v336 = vld [vmem:[#allocation5 + $0x430] sm:$0xf]
    %v337 = vld [vmem:[#allocation5 + $0x434] sm:$0xf]
    %v338 = vld [vmem:[#allocation5 + $0x438] sm:$0xf]
    %v339 = vld [vmem:[#allocation5 + $0x43c] sm:$0xf]
    %v340 = vld [vmem:[#allocation5 + $0x440] sm:$0xf]
    %v341 = vld [vmem:[#allocation5 + $0x444] sm:$0xf]
    %v342 = vld [vmem:[#allocation5 + $0x448] sm:$0xf]
    %v343 = vld [vmem:[#allocation5 + $0x44c] sm:$0xf]
    %v344 = vld [vmem:[#allocation5 + $0x450] sm:$0xf]
    %v345 = vld [vmem:[#allocation5 + $0x454] sm:$0xf]
    %v346 = vld [vmem:[#allocation5 + $0x458] sm:$0xf]
    %v347 = vld [vmem:[#allocation5 + $0x45c] sm:$0xf]
    %v348 = vld [vmem:[#allocation5 + $0x460] sm:$0xf]
    %v349 = vld [vmem:[#allocation5 + $0x464] sm:$0xf]
    %v350 = vld [vmem:[#allocation5 + $0x468] sm:$0xf]
    %v351 = vld [vmem:[#allocation5 + $0x46c] sm:$0xf]
    %v352 = vld [vmem:[#allocation5 + $0x470] sm:$0xf]
    %v353 = vld [vmem:[#allocation5 + $0x474] sm:$0xf]
    %v354 = vld [vmem:[#allocation5 + $0x478] sm:$0xf]
    %v355 = vld [vmem:[#allocation5 + $0x47c] sm:$0xf]
    %v356 = vld [vmem:[#allocation5 + $0x480] sm:$0xf]
    %v357 = vld [vmem:[#allocation5 + $0x484] sm:$0xf]
    %v358 = vld [vmem:[#allocation5 + $0x488] sm:$0xf]
    %v359 = vld [vmem:[#allocation5 + $0x48c] sm:$0xf]
    %v360 = vld [vmem:[#allocation5 + $0x490] sm:$0xf]
    %v361 = vld [vmem:[#allocation5 + $0x494] sm:$0xf]
    %v362 = vld [vmem:[#allocation5 + $0x498] sm:$0xf]
    %v363 = vld [vmem:[#allocation5 + $0x49c] sm:$0xf]
    %v364 = vld [vmem:[#allocation5 + $0x4a0] sm:$0xf]
    %v365 = vld [vmem:[#allocation5 + $0x4a4] sm:$0xf]
    %v366 = vld [vmem:[#allocation5 + $0x4a8] sm:$0xf]
    %v367 = vld [vmem:[#allocation5 + $0x4ac] sm:$0xf]
    %v368 = vld [vmem:[#allocation5 + $0x4b0] sm:$0xf]
    %v369 = vld [vmem:[#allocation5 + $0x4b4] sm:$0xf]
    %v370 = vld [vmem:[#allocation5 + $0x4b8] sm:$0xf]
    %v371 = vld [vmem:[#allocation5 + $0x4bc] sm:$0xf]
    %v372 = vld [vmem:[#allocation5 + $0x4c0] sm:$0xf]
    %v373 = vld [vmem:[#allocation5 + $0x4c4] sm:$0xf]
    %v374 = vld [vmem:[#allocation5 + $0x4c8] sm:$0xf]
    %v375 = vld [vmem:[#allocation5 + $0x4cc] sm:$0xf]
    %v376 = vld [vmem:[#allocation5 + $0x4d0] sm:$0xf]
    %v377 = vld [vmem:[#allocation5 + $0x4d4] sm:$0xf]
    %v378 = vld [vmem:[#allocation5 + $0x4d8] sm:$0xf]
    %v379 = vld [vmem:[#allocation5 + $0x4dc] sm:$0xf]
    %v380 = vld [vmem:[#allocation5 + $0x4e0] sm:$0xf]
    %v381 = vld [vmem:[#allocation5 + $0x4e4] sm:$0xf]
    %v382 = vld [vmem:[#allocation5 + $0x4e8] sm:$0xf]
    %v383 = vld [vmem:[#allocation5 + $0x4ec] sm:$0xf]
    %v384 = vld [vmem:[#allocation5 + $0x4f0] sm:$0xf]
    %v385 = vld [vmem:[#allocation5 + $0x4f4] sm:$0xf]
    %v386 = vld [vmem:[#allocation5 + $0x4f8] sm:$0xf]
    %v387 = vld [vmem:[#allocation5 + $0x4fc] sm:$0xf]
    %v388 = vld [vmem:[#allocation5 + $0x500] sm:$0xf]
    %v389 = vld [vmem:[#allocation5 + $0x504] sm:$0xf]
    %v390 = vld [vmem:[#allocation5 + $0x508] sm:$0xf]
    %v391 = vld [vmem:[#allocation5 + $0x50c] sm:$0xf]
    %v392 = vld [vmem:[#allocation5 + $0x510] sm:$0xf]
    %v393 = vld [vmem:[#allocation5 + $0x514] sm:$0xf]
    %v394 = vld [vmem:[#allocation5 + $0x518] sm:$0xf]
    %v395 = vld [vmem:[#allocation5 + $0x51c] sm:$0xf]
    %v396 = vld [vmem:[#allocation5 + $0x520] sm:$0xf]
    %v397 = vld [vmem:[#allocation5 + $0x524] sm:$0xf]
    %v398 = vld [vmem:[#allocation5 + $0x528] sm:$0xf]
    %v399 = vld [vmem:[#allocation5 + $0x52c] sm:$0xf]
    %v400 = vld [vmem:[#allocation5 + $0x530] sm:$0xf]
    %v401 = vld [vmem:[#allocation5 + $0x534] sm:$0xf]
    %v402 = vld [vmem:[#allocation5 + $0x538] sm:$0xf]
    %v403 = vld [vmem:[#allocation5 + $0x53c] sm:$0xf]
    %v404 = vld [vmem:[#allocation5 + $0x540] sm:$0xf]
    %v405 = vld [vmem:[#allocation5 + $0x544] sm:$0xf]
    %v406 = vld [vmem:[#allocation5 + $0x548] sm:$0xf]
    %v407 = vld [vmem:[#allocation5 + $0x54c] sm:$0xf]
    %v408 = vld [vmem:[#allocation5 + $0x550] sm:$0xf]
    %v409 = vld [vmem:[#allocation5 + $0x554] sm:$0xf]
    %v410 = vld [vmem:[#allocation5 + $0x558] sm:$0xf]
    %v411 = vld [vmem:[#allocation5 + $0x55c] sm:$0xf]
    %v412 = vld [vmem:[#allocation5 + $0x560] sm:$0xf]
    %v413 = vld [vmem:[#allocation5 + $0x564] sm:$0xf]
    %v414 = vld [vmem:[#allocation5 + $0x568] sm:$0xf]
    %v415 = vld [vmem:[#allocation5 + $0x56c] sm:$0xf]
    %v416 = vld [vmem:[#allocation5 + $0x570] sm:$0xf]
    %v417 = vld [vmem:[#allocation5 + $0x574] sm:$0xf]
    %v418 = vld [vmem:[#allocation5 + $0x578] sm:$0xf]
    %v419 = vld [vmem:[#allocation5 + $0x57c] sm:$0xf]
    %v420 = vld [vmem:[#allocation5 + $0x580] sm:$0xf]
    %v421 = vld [vmem:[#allocation5 + $0x584] sm:$0xf]
    %v422 = vld [vmem:[#allocation5 + $0x588] sm:$0xf]
    %v423 = vld [vmem:[#allocation5 + $0x58c] sm:$0xf]
    %v424 = vld [vmem:[#allocation5 + $0x590] sm:$0xf]
    %v425 = vld [vmem:[#allocation5 + $0x594] sm:$0xf]
    %v426 = vld [vmem:[#allocation5 + $0x598] sm:$0xf]
    %v427 = vld [vmem:[#allocation5 + $0x59c] sm:$0xf]
    %v428 = vld [vmem:[#allocation5 + $0x5a0] sm:$0xf]
    %v429 = vld [vmem:[#allocation5 + $0x5a4] sm:$0xf]
    %v430 = vld [vmem:[#allocation5 + $0x5a8] sm:$0xf]
    %v431 = vld [vmem:[#allocation5 + $0x5ac] sm:$0xf]
    %v432 = vld [vmem:[#allocation5 + $0x5b0] sm:$0xf]
    %v433 = vld [vmem:[#allocation5 + $0x5b4] sm:$0xf]
    %v434 = vld [vmem:[#allocation5 + $0x5b8] sm:$0xf]
    %v435 = vld [vmem:[#allocation5 + $0x5bc] sm:$0xf]
    %v436 = vld [vmem:[#allocation5 + $0x5c0] sm:$0xf]
    %v437 = vld [vmem:[#allocation5 + $0x5c4] sm:$0xf]
    %v438 = vld [vmem:[#allocation5 + $0x5c8] sm:$0xf]
    %v439 = vld [vmem:[#allocation5 + $0x5cc] sm:$0xf]
    %v440 = vld [vmem:[#allocation5 + $0x5d0] sm:$0xf]
    %v441 = vld [vmem:[#allocation5 + $0x5d4] sm:$0xf]
    %v442 = vld [vmem:[#allocation5 + $0x5d8] sm:$0xf]
    %v443 = vld [vmem:[#allocation5 + $0x5dc] sm:$0xf]
    %v444 = vld [vmem:[#allocation5 + $0x5e0] sm:$0xf]
    %v445 = vld [vmem:[#allocation5 + $0x5e4] sm:$0xf]
    %v446 = vld [vmem:[#allocation5 + $0x5e8] sm:$0xf]
    %v447 = vld [vmem:[#allocation5 + $0x5ec] sm:$0xf]
    %v448 = vld [vmem:[#allocation5 + $0x5f0] sm:$0xf]
    %v449 = vld [vmem:[#allocation5 + $0x5f4] sm:$0xf]
    %v450 = vld [vmem:[#allocation5 + $0x5f8] sm:$0xf]
    %v451 = vld [vmem:[#allocation5 + $0x5fc] sm:$0xf]
    %v452 = vld [vmem:[%s2] sm:$0x1]
    %v454 = vlaneseq
    %v455 = vshrl.u32 %v454, 7
    %v456 = vsub.s32 0, %v455
    %v457 = vrot.slane %v452, %v456
    %v483 = vunpack.c.l.b16 %v44
    %v484 = vunpack.c.h.b16 %v44
    %v485 = vunpack.c.l.b16 %v45
    %v486 = vunpack.c.h.b16 %v45
    %v487 = vunpack.c.l.b16 %v46
    %v488 = vunpack.c.h.b16 %v46
    %v489 = vunpack.c.l.b16 %v47
    %v490 = vunpack.c.h.b16 %v47
    %v491 = vunpack.c.l.b16 %v48
    %v492 = vunpack.c.h.b16 %v48
    %v493 = vunpack.c.l.b16 %v49
    %v494 = vunpack.c.h.b16 %v49
    %v495 = vunpack.c.l.b16 %v50
    %v496 = vunpack.c.h.b16 %v50
    %v497 = vunpack.c.l.b16 %v51
    %v498 = vunpack.c.h.b16 %v51
    %v499 = vunpack.c.l.b16 %v52
    %v500 = vunpack.c.h.b16 %v52
    %v501 = vunpack.c.l.b16 %v53
    %v502 = vunpack.c.h.b16 %v53
    %v503 = vunpack.c.l.b16 %v54
    %v504 = vunpack.c.h.b16 %v54
    %v505 = vunpack.c.l.b16 %v55
    %v506 = vunpack.c.h.b16 %v55
    %v507 = vunpack.c.l.b16 %v56
    %v508 = vunpack.c.h.b16 %v56
    %v509 = vunpack.c.l.b16 %v57
    %v510 = vunpack.c.h.b16 %v57
    %v511 = vunpack.c.l.b16 %v58
    %v512 = vunpack.c.h.b16 %v58
    %v513 = vunpack.c.l.b16 %v59
    %v514 = vunpack.c.h.b16 %v59
    %v515 = vunpack.c.l.b16 %v60
    %v516 = vunpack.c.h.b16 %v60
    %v517 = vunpack.c.l.b16 %v61
    %v518 = vunpack.c.h.b16 %v61
    %v519 = vunpack.c.l.b16 %v62
    %v520 = vunpack.c.h.b16 %v62
    %v521 = vunpack.c.l.b16 %v63
    %v522 = vunpack.c.h.b16 %v63
    %v523 = vunpack.c.l.b16 %v64
    %v524 = vunpack.c.h.b16 %v64
    %v525 = vunpack.c.l.b16 %v65
    %v526 = vunpack.c.h.b16 %v65
    %v527 = vunpack.c.l.b16 %v66
    %v528 = vunpack.c.h.b16 %v66
    %v529 = vunpack.c.l.b16 %v67
    %v530 = vunpack.c.h.b16 %v67
    %v531 = vpack.c.b16 %v507, %v483
    %v532 = vpack.c.b16 %v508, %v484
    %v533 = vpack.c.b16 %v509, %v485
    %v534 = vpack.c.b16 %v510, %v486
    %v535 = vpack.c.b16 %v511, %v487
    %v536 = vpack.c.b16 %v512, %v488
    %v537 = vpack.c.b16 %v513, %v489
    %v538 = vpack.c.b16 %v514, %v490
    %v539 = vpack.c.b16 %v515, %v491
    %v540 = vpack.c.b16 %v516, %v492
    %v541 = vpack.c.b16 %v517, %v493
    %v542 = vpack.c.b16 %v518, %v494
    %v543 = vpack.c.b16 %v519, %v495
    %v544 = vpack.c.b16 %v520, %v496
    %v545 = vpack.c.b16 %v521, %v497
    %v546 = vpack.c.b16 %v522, %v498
    %v547 = vpack.c.b16 %v523, %v499
    %v548 = vpack.c.b16 %v524, %v500
    %v549 = vpack.c.b16 %v525, %v501
    %v550 = vpack.c.b16 %v526, %v502
    %v551 = vpack.c.b16 %v527, %v503
    %v552 = vpack.c.b16 %v528, %v504
    %v553 = vpack.c.b16 %v529, %v505
    %v554 = vpack.c.b16 %v530, %v506
    %v963 = vunpack.c.l.b16 %v68
    %v964 = vunpack.c.l.b16 %v69
    %v965 = vunpack.c.l.b16 %v70
    %v966 = vunpack.c.l.b16 %v71
    %v967 = vunpack.c.l.b16 %v72
    %v968 = vunpack.c.l.b16 %v73
    %v969 = vunpack.c.l.b16 %v74
    %v970 = vunpack.c.l.b16 %v75
    %v971 = vunpack.c.l.b16 %v76
    %v972 = vunpack.c.l.b16 %v77
    %v973 = vunpack.c.l.b16 %v78
    %v974 = vunpack.c.l.b16 %v79
    %v975 = vunpack.c.l.b16 %v80
    %v976 = vunpack.c.l.b16 %v81
    %v977 = vunpack.c.l.b16 %v82
    %v978 = vunpack.c.l.b16 %v83
    %v979 = vunpack.c.l.b16 %v84
    %v980 = vunpack.c.l.b16 %v85
    %v981 = vunpack.c.l.b16 %v86
    %v982 = vunpack.c.l.b16 %v87
    %v983 = vunpack.c.l.b16 %v88
    %v984 = vunpack.c.l.b16 %v89
    %v985 = vunpack.c.l.b16 %v90
    %v986 = vunpack.c.l.b16 %v91
    %v987 = vunpack.c.l.b16 %v92
    %v988 = vunpack.c.l.b16 %v93
    %v989 = vunpack.c.l.b16 %v94
    %v990 = vunpack.c.l.b16 %v95
    %v991 = vunpack.c.l.b16 %v96
    %v992 = vunpack.c.l.b16 %v97
    %v993 = vunpack.c.l.b16 %v98
    %v994 = vunpack.c.l.b16 %v99
    %v995 = vunpack.c.l.b16 %v100
    %v996 = vunpack.c.l.b16 %v101
    %v997 = vunpack.c.l.b16 %v102
    %v998 = vunpack.c.l.b16 %v103
    %v999 = vunpack.c.l.b16 %v104
    %v1000 = vunpack.c.l.b16 %v105
    %v1001 = vunpack.c.l.b16 %v106
    %v1002 = vunpack.c.l.b16 %v107
    %v1003 = vunpack.c.l.b16 %v108
    %v1004 = vunpack.c.l.b16 %v109
    %v1005 = vunpack.c.l.b16 %v110
    %v1006 = vunpack.c.l.b16 %v111
    %v1007 = vunpack.c.l.b16 %v112
    %v1008 = vunpack.c.l.b16 %v113
    %v1009 = vunpack.c.l.b16 %v114
    %v1010 = vunpack.c.l.b16 %v115
    %v1011 = vunpack.c.l.b16 %v116
    %v1012 = vunpack.c.l.b16 %v117
    %v1013 = vunpack.c.l.b16 %v118
    %v1014 = vunpack.c.l.b16 %v119
    %v1015 = vunpack.c.l.b16 %v120
    %v1016 = vunpack.c.l.b16 %v121
    %v1017 = vunpack.c.l.b16 %v122
    %v1018 = vunpack.c.l.b16 %v123
    %v1019 = vunpack.c.l.b16 %v124
    %v1020 = vunpack.c.l.b16 %v125
    %v1021 = vunpack.c.l.b16 %v126
    %v1022 = vunpack.c.l.b16 %v127
    %v1023 = vunpack.c.l.b16 %v128
    %v1024 = vunpack.c.l.b16 %v129
    %v1025 = vunpack.c.l.b16 %v130
    %v1026 = vunpack.c.l.b16 %v131
    %v1027 = vunpack.c.l.b16 %v132
    %v1028 = vunpack.c.l.b16 %v133
    %v1029 = vunpack.c.l.b16 %v134
    %v1030 = vunpack.c.l.b16 %v135
    %v1031 = vunpack.c.l.b16 %v136
    %v1032 = vunpack.c.l.b16 %v137
    %v1033 = vunpack.c.l.b16 %v138
    %v1034 = vunpack.c.l.b16 %v139
    %v1035 = vunpack.c.l.b16 %v140
    %v1036 = vunpack.c.l.b16 %v141
    %v1037 = vunpack.c.l.b16 %v142
    %v1038 = vunpack.c.l.b16 %v143
    %v1039 = vunpack.c.l.b16 %v144
    %v1040 = vunpack.c.l.b16 %v145
    %v1041 = vunpack.c.l.b16 %v146
    %v1042 = vunpack.c.l.b16 %v147
    %v1043 = vunpack.c.l.b16 %v148
    %v1044 = vunpack.c.l.b16 %v149
    %v1045 = vunpack.c.l.b16 %v150
    %v1046 = vunpack.c.l.b16 %v151
    %v1047 = vunpack.c.l.b16 %v152
    %v1048 = vunpack.c.l.b16 %v153
    %v1049 = vunpack.c.l.b16 %v154
    %v1050 = vunpack.c.l.b16 %v155
    %v1051 = vunpack.c.l.b16 %v156
    %v1052 = vunpack.c.l.b16 %v157
    %v1053 = vunpack.c.l.b16 %v158
    %v1054 = vunpack.c.l.b16 %v159
    %v1055 = vunpack.c.l.b16 %v160
    %v1056 = vunpack.c.l.b16 %v161
    %v1057 = vunpack.c.l.b16 %v162
    %v1058 = vunpack.c.l.b16 %v163
    %v1059 = vunpack.c.l.b16 %v164
    %v1060 = vunpack.c.l.b16 %v165
    %v1061 = vunpack.c.l.b16 %v166
    %v1062 = vunpack.c.l.b16 %v167
    %v1063 = vunpack.c.l.b16 %v168
    %v1064 = vunpack.c.l.b16 %v169
    %v1065 = vunpack.c.l.b16 %v170
    %v1066 = vunpack.c.l.b16 %v171
    %v1067 = vunpack.c.l.b16 %v172
    %v1068 = vunpack.c.l.b16 %v173
    %v1069 = vunpack.c.l.b16 %v174
    %v1070 = vunpack.c.l.b16 %v175
    %v1071 = vunpack.c.l.b16 %v176
    %v1072 = vunpack.c.l.b16 %v177
    %v1073 = vunpack.c.l.b16 %v178
    %v1074 = vunpack.c.l.b16 %v179
    %v1075 = vunpack.c.l.b16 %v180
    %v1076 = vunpack.c.l.b16 %v181
    %v1077 = vunpack.c.l.b16 %v182
    %v1078 = vunpack.c.l.b16 %v183
    %v1079 = vunpack.c.l.b16 %v184
    %v1080 = vunpack.c.l.b16 %v185
    %v1081 = vunpack.c.l.b16 %v186
    %v1082 = vunpack.c.l.b16 %v187
    %v1083 = vunpack.c.l.b16 %v188
    %v1084 = vunpack.c.l.b16 %v189
    %v1085 = vunpack.c.l.b16 %v190
    %v1086 = vunpack.c.l.b16 %v191
    %v1087 = vunpack.c.l.b16 %v192
    %v1088 = vunpack.c.l.b16 %v193
    %v1089 = vunpack.c.l.b16 %v194
    %v1090 = vunpack.c.l.b16 %v195
    %v1091 = vunpack.c.l.b16 %v196
    %v1092 = vunpack.c.l.b16 %v197
    %v1093 = vunpack.c.l.b16 %v198
    %v1094 = vunpack.c.l.b16 %v199
    %v1095 = vunpack.c.l.b16 %v200
    %v1096 = vunpack.c.l.b16 %v201
    %v1097 = vunpack.c.l.b16 %v202
    %v1098 = vunpack.c.l.b16 %v203
    %v1099 = vunpack.c.l.b16 %v204
    %v1100 = vunpack.c.l.b16 %v205
    %v1101 = vunpack.c.l.b16 %v206
    %v1102 = vunpack.c.l.b16 %v207
    %v1103 = vunpack.c.l.b16 %v208
    %v1104 = vunpack.c.l.b16 %v209
    %v1105 = vunpack.c.l.b16 %v210
    %v1106 = vunpack.c.l.b16 %v211
    %v1107 = vunpack.c.l.b16 %v212
    %v1108 = vunpack.c.l.b16 %v213
    %v1109 = vunpack.c.l.b16 %v214
    %v1110 = vunpack.c.l.b16 %v215
    %v1111 = vunpack.c.l.b16 %v216
    %v1112 = vunpack.c.l.b16 %v217
    %v1113 = vunpack.c.l.b16 %v218
    %v1114 = vunpack.c.l.b16 %v219
    %v1115 = vunpack.c.l.b16 %v220
    %v1116 = vunpack.c.l.b16 %v221
    %v1117 = vunpack.c.l.b16 %v222
    %v1118 = vunpack.c.l.b16 %v223
    %v1119 = vunpack.c.l.b16 %v224
    %v1120 = vunpack.c.l.b16 %v225
    %v1121 = vunpack.c.l.b16 %v226
    %v1122 = vunpack.c.l.b16 %v227
    %v1123 = vunpack.c.l.b16 %v228
    %v1124 = vunpack.c.l.b16 %v229
    %v1125 = vunpack.c.l.b16 %v230
    %v1126 = vunpack.c.l.b16 %v231
    %v1127 = vunpack.c.l.b16 %v232
    %v1128 = vunpack.c.l.b16 %v233
    %v1129 = vunpack.c.l.b16 %v234
    %v1130 = vunpack.c.l.b16 %v235
    %v1131 = vunpack.c.l.b16 %v236
    %v1132 = vunpack.c.l.b16 %v237
    %v1133 = vunpack.c.l.b16 %v238
    %v1134 = vunpack.c.l.b16 %v239
    %v1135 = vunpack.c.l.b16 %v240
    %v1136 = vunpack.c.l.b16 %v241
    %v1137 = vunpack.c.l.b16 %v242
    %v1138 = vunpack.c.l.b16 %v243
    %v1139 = vunpack.c.l.b16 %v244
    %v1140 = vunpack.c.l.b16 %v245
    %v1141 = vunpack.c.l.b16 %v246
    %v1142 = vunpack.c.l.b16 %v247
    %v1143 = vunpack.c.l.b16 %v248
    %v1144 = vunpack.c.l.b16 %v249
    %v1145 = vunpack.c.l.b16 %v250
    %v1146 = vunpack.c.l.b16 %v251
    %v1147 = vunpack.c.l.b16 %v252
    %v1148 = vunpack.c.l.b16 %v253
    %v1149 = vunpack.c.l.b16 %v254
    %v1150 = vunpack.c.l.b16 %v255
    %v1151 = vunpack.c.l.b16 %v256
    %v1152 = vunpack.c.l.b16 %v257
    %v1153 = vunpack.c.l.b16 %v258
    %v1154 = vunpack.c.l.b16 %v259
    %v1155 = vunpack.c.l.b16 %v260
    %v1156 = vunpack.c.l.b16 %v261
    %v1157 = vunpack.c.l.b16 %v262
    %v1158 = vunpack.c.l.b16 %v263
    %v1159 = vunpack.c.l.b16 %v264
    %v1160 = vunpack.c.l.b16 %v265
    %v1161 = vunpack.c.l.b16 %v266
    %v1162 = vunpack.c.l.b16 %v267
    %v1163 = vunpack.c.l.b16 %v268
    %v1164 = vunpack.c.l.b16 %v269
    %v1165 = vunpack.c.l.b16 %v270
    %v1166 = vunpack.c.l.b16 %v271
    %v1167 = vunpack.c.l.b16 %v272
    %v1168 = vunpack.c.l.b16 %v273
    %v1169 = vunpack.c.l.b16 %v274
    %v1170 = vunpack.c.l.b16 %v275
    %v1171 = vunpack.c.l.b16 %v276
    %v1172 = vunpack.c.l.b16 %v277
    %v1173 = vunpack.c.l.b16 %v278
    %v1174 = vunpack.c.l.b16 %v279
    %v1175 = vunpack.c.l.b16 %v280
    %v1176 = vunpack.c.l.b16 %v281
    %v1177 = vunpack.c.l.b16 %v282
    %v1178 = vunpack.c.l.b16 %v283
    %v1179 = vunpack.c.l.b16 %v284
    %v1180 = vunpack.c.l.b16 %v285
    %v1181 = vunpack.c.l.b16 %v286
    %v1182 = vunpack.c.l.b16 %v287
    %v1183 = vunpack.c.l.b16 %v288
    %v1184 = vunpack.c.l.b16 %v289
    %v1185 = vunpack.c.l.b16 %v290
    %v1186 = vunpack.c.l.b16 %v291
    %v1187 = vunpack.c.l.b16 %v292
    %v1188 = vunpack.c.l.b16 %v293
    %v1189 = vunpack.c.l.b16 %v294
    %v1190 = vunpack.c.l.b16 %v295
    %v1191 = vunpack.c.l.b16 %v296
    %v1192 = vunpack.c.l.b16 %v297
    %v1193 = vunpack.c.l.b16 %v298
    %v1194 = vunpack.c.l.b16 %v299
    %v1195 = vunpack.c.l.b16 %v300
    %v1196 = vunpack.c.l.b16 %v301
    %v1197 = vunpack.c.l.b16 %v302
    %v1198 = vunpack.c.l.b16 %v303
    %v1199 = vunpack.c.l.b16 %v304
    %v1200 = vunpack.c.l.b16 %v305
    %v1201 = vunpack.c.l.b16 %v306
    %v1202 = vunpack.c.l.b16 %v307
    %v1203 = vunpack.c.l.b16 %v308
    %v1204 = vunpack.c.l.b16 %v309
    %v1205 = vunpack.c.l.b16 %v310
    %v1206 = vunpack.c.l.b16 %v311
    %v1207 = vunpack.c.l.b16 %v312
    %v1208 = vunpack.c.l.b16 %v313
    %v1209 = vunpack.c.l.b16 %v314
    %v1210 = vunpack.c.l.b16 %v315
    %v1211 = vunpack.c.l.b16 %v316
    %v1212 = vunpack.c.l.b16 %v317
    %v1213 = vunpack.c.l.b16 %v318
    %v1214 = vunpack.c.l.b16 %v319
    %v1215 = vunpack.c.l.b16 %v320
    %v1216 = vunpack.c.l.b16 %v321
    %v1217 = vunpack.c.l.b16 %v322
    %v1218 = vunpack.c.l.b16 %v323
    %v1219 = vunpack.c.l.b16 %v324
    %v1220 = vunpack.c.l.b16 %v325
    %v1221 = vunpack.c.l.b16 %v326
    %v1222 = vunpack.c.l.b16 %v327
    %v1223 = vunpack.c.l.b16 %v328
    %v1224 = vunpack.c.l.b16 %v329
    %v1225 = vunpack.c.l.b16 %v330
    %v1226 = vunpack.c.l.b16 %v331
    %v1227 = vunpack.c.l.b16 %v332
    %v1228 = vunpack.c.l.b16 %v333
    %v1229 = vunpack.c.l.b16 %v334
    %v1230 = vunpack.c.l.b16 %v335
    %v1231 = vunpack.c.l.b16 %v336
    %v1232 = vunpack.c.l.b16 %v337
    %v1233 = vunpack.c.l.b16 %v338
    %v1234 = vunpack.c.l.b16 %v339
    %v1235 = vunpack.c.l.b16 %v340
    %v1236 = vunpack.c.l.b16 %v341
    %v1237 = vunpack.c.l.b16 %v342
    %v1238 = vunpack.c.l.b16 %v343
    %v1239 = vunpack.c.l.b16 %v344
    %v1240 = vunpack.c.l.b16 %v345
    %v1241 = vunpack.c.l.b16 %v346
    %v1242 = vunpack.c.l.b16 %v347
    %v1243 = vunpack.c.l.b16 %v348
    %v1244 = vunpack.c.l.b16 %v349
    %v1245 = vunpack.c.l.b16 %v350
    %v1246 = vunpack.c.l.b16 %v351
    %v1247 = vunpack.c.l.b16 %v352
    %v1248 = vunpack.c.l.b16 %v353
    %v1249 = vunpack.c.l.b16 %v354
    %v1250 = vunpack.c.l.b16 %v355
    %v1251 = vunpack.c.l.b16 %v356
    %v1252 = vunpack.c.l.b16 %v357
    %v1253 = vunpack.c.l.b16 %v358
    %v1254 = vunpack.c.l.b16 %v359
    %v1255 = vunpack.c.l.b16 %v360
    %v1256 = vunpack.c.l.b16 %v361
    %v1257 = vunpack.c.l.b16 %v362
    %v1258 = vunpack.c.l.b16 %v363
    %v1259 = vunpack.c.l.b16 %v364
    %v1260 = vunpack.c.l.b16 %v365
    %v1261 = vunpack.c.l.b16 %v366
    %v1262 = vunpack.c.l.b16 %v367
    %v1263 = vunpack.c.l.b16 %v368
    %v1264 = vunpack.c.l.b16 %v369
    %v1265 = vunpack.c.l.b16 %v370
    %v1266 = vunpack.c.l.b16 %v371
    %v1267 = vunpack.c.l.b16 %v372
    %v1268 = vunpack.c.l.b16 %v373
    %v1269 = vunpack.c.l.b16 %v374
    %v1270 = vunpack.c.l.b16 %v375
    %v1271 = vunpack.c.l.b16 %v376
    %v1272 = vunpack.c.l.b16 %v377
    %v1273 = vunpack.c.l.b16 %v378
    %v1274 = vunpack.c.l.b16 %v379
    %v1275 = vunpack.c.l.b16 %v380
    %v1276 = vunpack.c.l.b16 %v381
    %v1277 = vunpack.c.l.b16 %v382
    %v1278 = vunpack.c.l.b16 %v383
    %v1279 = vunpack.c.l.b16 %v384
    %v1280 = vunpack.c.l.b16 %v385
    %v1281 = vunpack.c.l.b16 %v386
    %v1282 = vunpack.c.l.b16 %v387
    %v1283 = vunpack.c.l.b16 %v388
    %v1284 = vunpack.c.l.b16 %v389
    %v1285 = vunpack.c.l.b16 %v390
    %v1286 = vunpack.c.l.b16 %v391
    %v1287 = vunpack.c.l.b16 %v392
    %v1288 = vunpack.c.l.b16 %v393
    %v1289 = vunpack.c.l.b16 %v394
    %v1290 = vunpack.c.l.b16 %v395
    %v1291 = vunpack.c.l.b16 %v396
    %v1292 = vunpack.c.l.b16 %v397
    %v1293 = vunpack.c.l.b16 %v398
    %v1294 = vunpack.c.l.b16 %v399
    %v1295 = vunpack.c.l.b16 %v400
    %v1296 = vunpack.c.l.b16 %v401
    %v1297 = vunpack.c.l.b16 %v402
    %v1298 = vunpack.c.l.b16 %v403
    %v1299 = vunpack.c.l.b16 %v404
    %v1300 = vunpack.c.l.b16 %v405
    %v1301 = vunpack.c.l.b16 %v406
    %v1302 = vunpack.c.l.b16 %v407
    %v1303 = vunpack.c.l.b16 %v408
    %v1304 = vunpack.c.l.b16 %v409
    %v1305 = vunpack.c.l.b16 %v410
    %v1306 = vunpack.c.l.b16 %v411
    %v1307 = vunpack.c.l.b16 %v412
    %v1308 = vunpack.c.l.b16 %v413
    %v1309 = vunpack.c.l.b16 %v414
    %v1310 = vunpack.c.l.b16 %v415
    %v1311 = vunpack.c.l.b16 %v416
    %v1312 = vunpack.c.l.b16 %v417
    %v1313 = vunpack.c.l.b16 %v418
    %v1314 = vunpack.c.l.b16 %v419
    %v1315 = vunpack.c.l.b16 %v420
    %v1316 = vunpack.c.l.b16 %v421
    %v1317 = vunpack.c.l.b16 %v422
    %v1318 = vunpack.c.l.b16 %v423
    %v1319 = vunpack.c.l.b16 %v424
    %v1320 = vunpack.c.l.b16 %v425
    %v1321 = vunpack.c.l.b16 %v426
    %v1322 = vunpack.c.l.b16 %v427
    %v1323 = vunpack.c.l.b16 %v428
    %v1324 = vunpack.c.l.b16 %v429
    %v1325 = vunpack.c.l.b16 %v430
    %v1326 = vunpack.c.l.b16 %v431
    %v1327 = vunpack.c.l.b16 %v432
    %v1328 = vunpack.c.l.b16 %v433
    %v1329 = vunpack.c.l.b16 %v434
    %v1330 = vunpack.c.l.b16 %v435
    %v1331 = vunpack.c.l.b16 %v436
    %v1332 = vunpack.c.l.b16 %v437
    %v1333 = vunpack.c.l.b16 %v438
    %v1334 = vunpack.c.l.b16 %v439
    %v1335 = vunpack.c.l.b16 %v440
    %v1336 = vunpack.c.l.b16 %v441
    %v1337 = vunpack.c.l.b16 %v442
    %v1338 = vunpack.c.l.b16 %v443
    %v1339 = vunpack.c.l.b16 %v444
    %v1340 = vunpack.c.l.b16 %v445
    %v1341 = vunpack.c.l.b16 %v446
    %v1342 = vunpack.c.l.b16 %v447
    %v1343 = vunpack.c.l.b16 %v448
    %v1344 = vunpack.c.l.b16 %v449
    %v1345 = vunpack.c.l.b16 %v450
    %v1346 = vunpack.c.l.b16 %v451
    %v1347 = vpack.c.b16 %v964, %v963
    %v1348 = vpack.c.b16 %v966, %v965
    %v1349 = vpack.c.b16 %v968, %v967
    %v1350 = vpack.c.b16 %v970, %v969
    %v1351 = vpack.c.b16 %v972, %v971
    %v1352 = vpack.c.b16 %v974, %v973
    %v1353 = vpack.c.b16 %v976, %v975
    %v1354 = vpack.c.b16 %v978, %v977
    %v1355 = vpack.c.b16 %v980, %v979
    %v1356 = vpack.c.b16 %v982, %v981
    %v1357 = vpack.c.b16 %v984, %v983
    %v1358 = vpack.c.b16 %v986, %v985
    %v1359 = vpack.c.b16 %v988, %v987
    %v1360 = vpack.c.b16 %v990, %v989
    %v1361 = vpack.c.b16 %v992, %v991
    %v1362 = vpack.c.b16 %v994, %v993
    %v1363 = vpack.c.b16 %v996, %v995
    %v1364 = vpack.c.b16 %v998, %v997
    %v1365 = vpack.c.b16 %v1000, %v999
    %v1366 = vpack.c.b16 %v1002, %v1001
    %v1367 = vpack.c.b16 %v1004, %v1003
    %v1368 = vpack.c.b16 %v1006, %v1005
    %v1369 = vpack.c.b16 %v1008, %v1007
    %v1370 = vpack.c.b16 %v1010, %v1009
    %v1371 = vpack.c.b16 %v1012, %v1011
    %v1372 = vpack.c.b16 %v1014, %v1013
    %v1373 = vpack.c.b16 %v1016, %v1015
    %v1374 = vpack.c.b16 %v1018, %v1017
    %v1375 = vpack.c.b16 %v1020, %v1019
    %v1376 = vpack.c.b16 %v1022, %v1021
    %v1377 = vpack.c.b16 %v1024, %v1023
    %v1378 = vpack.c.b16 %v1026, %v1025
    %v1379 = vpack.c.b16 %v1028, %v1027
    %v1380 = vpack.c.b16 %v1030, %v1029
    %v1381 = vpack.c.b16 %v1032, %v1031
    %v1382 = vpack.c.b16 %v1034, %v1033
    %v1383 = vpack.c.b16 %v1036, %v1035
    %v1384 = vpack.c.b16 %v1038, %v1037
    %v1385 = vpack.c.b16 %v1040, %v1039
    %v1386 = vpack.c.b16 %v1042, %v1041
    %v1387 = vpack.c.b16 %v1044, %v1043
    %v1388 = vpack.c.b16 %v1046, %v1045
    %v1389 = vpack.c.b16 %v1048, %v1047
    %v1390 = vpack.c.b16 %v1050, %v1049
    %v1391 = vpack.c.b16 %v1052, %v1051
    %v1392 = vpack.c.b16 %v1054, %v1053
    %v1393 = vpack.c.b16 %v1056, %v1055
    %v1394 = vpack.c.b16 %v1058, %v1057
    %v1395 = vpack.c.b16 %v1060, %v1059
    %v1396 = vpack.c.b16 %v1062, %v1061
    %v1397 = vpack.c.b16 %v1064, %v1063
    %v1398 = vpack.c.b16 %v1066, %v1065
    %v1399 = vpack.c.b16 %v1068, %v1067
    %v1400 = vpack.c.b16 %v1070, %v1069
    %v1401 = vpack.c.b16 %v1072, %v1071
    %v1402 = vpack.c.b16 %v1074, %v1073
    %v1403 = vpack.c.b16 %v1076, %v1075
    %v1404 = vpack.c.b16 %v1078, %v1077
    %v1405 = vpack.c.b16 %v1080, %v1079
    %v1406 = vpack.c.b16 %v1082, %v1081
    %v1407 = vpack.c.b16 %v1084, %v1083
    %v1408 = vpack.c.b16 %v1086, %v1085
    %v1409 = vpack.c.b16 %v1088, %v1087
    %v1410 = vpack.c.b16 %v1090, %v1089
    %v1411 = vpack.c.b16 %v1092, %v1091
    %v1412 = vpack.c.b16 %v1094, %v1093
    %v1413 = vpack.c.b16 %v1096, %v1095
    %v1414 = vpack.c.b16 %v1098, %v1097
    %v1415 = vpack.c.b16 %v1100, %v1099
    %v1416 = vpack.c.b16 %v1102, %v1101
    %v1417 = vpack.c.b16 %v1104, %v1103
    %v1418 = vpack.c.b16 %v1106, %v1105
    %v1419 = vpack.c.b16 %v1108, %v1107
    %v1420 = vpack.c.b16 %v1110, %v1109
    %v1421 = vpack.c.b16 %v1112, %v1111
    %v1422 = vpack.c.b16 %v1114, %v1113
    %v1423 = vpack.c.b16 %v1116, %v1115
    %v1424 = vpack.c.b16 %v1118, %v1117
    %v1425 = vpack.c.b16 %v1120, %v1119
    %v1426 = vpack.c.b16 %v1122, %v1121
    %v1427 = vpack.c.b16 %v1124, %v1123
    %v1428 = vpack.c.b16 %v1126, %v1125
    %v1429 = vpack.c.b16 %v1128, %v1127
    %v1430 = vpack.c.b16 %v1130, %v1129
    %v1431 = vpack.c.b16 %v1132, %v1131
    %v1432 = vpack.c.b16 %v1134, %v1133
    %v1433 = vpack.c.b16 %v1136, %v1135
    %v1434 = vpack.c.b16 %v1138, %v1137
    %v1435 = vpack.c.b16 %v1140, %v1139
    %v1436 = vpack.c.b16 %v1142, %v1141
    %v1437 = vpack.c.b16 %v1144, %v1143
    %v1438 = vpack.c.b16 %v1146, %v1145
    %v1439 = vpack.c.b16 %v1148, %v1147
    %v1440 = vpack.c.b16 %v1150, %v1149
    %v1441 = vpack.c.b16 %v1152, %v1151
    %v1442 = vpack.c.b16 %v1154, %v1153
    %v1443 = vpack.c.b16 %v1156, %v1155
    %v1444 = vpack.c.b16 %v1158, %v1157
    %v1445 = vpack.c.b16 %v1160, %v1159
    %v1446 = vpack.c.b16 %v1162, %v1161
    %v1447 = vpack.c.b16 %v1164, %v1163
    %v1448 = vpack.c.b16 %v1166, %v1165
    %v1449 = vpack.c.b16 %v1168, %v1167
    %v1450 = vpack.c.b16 %v1170, %v1169
    %v1451 = vpack.c.b16 %v1172, %v1171
    %v1452 = vpack.c.b16 %v1174, %v1173
    %v1453 = vpack.c.b16 %v1176, %v1175
    %v1454 = vpack.c.b16 %v1178, %v1177
    %v1455 = vpack.c.b16 %v1180, %v1179
    %v1456 = vpack.c.b16 %v1182, %v1181
    %v1457 = vpack.c.b16 %v1184, %v1183
    %v1458 = vpack.c.b16 %v1186, %v1185
    %v1459 = vpack.c.b16 %v1188, %v1187
    %v1460 = vpack.c.b16 %v1190, %v1189
    %v1461 = vpack.c.b16 %v1192, %v1191
    %v1462 = vpack.c.b16 %v1194, %v1193
    %v1463 = vpack.c.b16 %v1196, %v1195
    %v1464 = vpack.c.b16 %v1198, %v1197
    %v1465 = vpack.c.b16 %v1200, %v1199
    %v1466 = vpack.c.b16 %v1202, %v1201
    %v1467 = vpack.c.b16 %v1204, %v1203
    %v1468 = vpack.c.b16 %v1206, %v1205
    %v1469 = vpack.c.b16 %v1208, %v1207
    %v1470 = vpack.c.b16 %v1210, %v1209
    %v1471 = vpack.c.b16 %v1212, %v1211
    %v1472 = vpack.c.b16 %v1214, %v1213
    %v1473 = vpack.c.b16 %v1216, %v1215
    %v1474 = vpack.c.b16 %v1218, %v1217
    %v1475 = vpack.c.b16 %v1220, %v1219
    %v1476 = vpack.c.b16 %v1222, %v1221
    %v1477 = vpack.c.b16 %v1224, %v1223
    %v1478 = vpack.c.b16 %v1226, %v1225
    %v1479 = vpack.c.b16 %v1228, %v1227
    %v1480 = vpack.c.b16 %v1230, %v1229
    %v1481 = vpack.c.b16 %v1232, %v1231
    %v1482 = vpack.c.b16 %v1234, %v1233
    %v1483 = vpack.c.b16 %v1236, %v1235
    %v1484 = vpack.c.b16 %v1238, %v1237
    %v1485 = vpack.c.b16 %v1240, %v1239
    %v1486 = vpack.c.b16 %v1242, %v1241
    %v1487 = vpack.c.b16 %v1244, %v1243
    %v1488 = vpack.c.b16 %v1246, %v1245
    %v1489 = vpack.c.b16 %v1248, %v1247
    %v1490 = vpack.c.b16 %v1250, %v1249
    %v1491 = vpack.c.b16 %v1252, %v1251
    %v1492 = vpack.c.b16 %v1254, %v1253
    %v1493 = vpack.c.b16 %v1256, %v1255
    %v1494 = vpack.c.b16 %v1258, %v1257
    %v1495 = vpack.c.b16 %v1260, %v1259
    %v1496 = vpack.c.b16 %v1262, %v1261
    %v1497 = vpack.c.b16 %v1264, %v1263
    %v1498 = vpack.c.b16 %v1266, %v1265
    %v1499 = vpack.c.b16 %v1268, %v1267
    %v1500 = vpack.c.b16 %v1270, %v1269
    %v1501 = vpack.c.b16 %v1272, %v1271
    %v1502 = vpack.c.b16 %v1274, %v1273
    %v1503 = vpack.c.b16 %v1276, %v1275
    %v1504 = vpack.c.b16 %v1278, %v1277
    %v1505 = vpack.c.b16 %v1280, %v1279
    %v1506 = vpack.c.b16 %v1282, %v1281
    %v1507 = vpack.c.b16 %v1284, %v1283
    %v1508 = vpack.c.b16 %v1286, %v1285
    %v1509 = vpack.c.b16 %v1288, %v1287
    %v1510 = vpack.c.b16 %v1290, %v1289
    %v1511 = vpack.c.b16 %v1292, %v1291
    %v1512 = vpack.c.b16 %v1294, %v1293
    %v1513 = vpack.c.b16 %v1296, %v1295
    %v1514 = vpack.c.b16 %v1298, %v1297
    %v1515 = vpack.c.b16 %v1300, %v1299
    %v1516 = vpack.c.b16 %v1302, %v1301
    %v1517 = vpack.c.b16 %v1304, %v1303
    %v1518 = vpack.c.b16 %v1306, %v1305
    %v1519 = vpack.c.b16 %v1308, %v1307
    %v1520 = vpack.c.b16 %v1310, %v1309
    %v1521 = vpack.c.b16 %v1312, %v1311
    %v1522 = vpack.c.b16 %v1314, %v1313
    %v1523 = vpack.c.b16 %v1316, %v1315
    %v1524 = vpack.c.b16 %v1318, %v1317
    %v1525 = vpack.c.b16 %v1320, %v1319
    %v1526 = vpack.c.b16 %v1322, %v1321
    %v1527 = vpack.c.b16 %v1324, %v1323
    %v1528 = vpack.c.b16 %v1326, %v1325
    %v1529 = vpack.c.b16 %v1328, %v1327
    %v1530 = vpack.c.b16 %v1330, %v1329
    %v1531 = vpack.c.b16 %v1332, %v1331
    %v1532 = vpack.c.b16 %v1334, %v1333
    %v1533 = vpack.c.b16 %v1336, %v1335
    %v1534 = vpack.c.b16 %v1338, %v1337
    %v1535 = vpack.c.b16 %v1340, %v1339
    %v1536 = vpack.c.b16 %v1342, %v1341
    %v1537 = vpack.c.b16 %v1344, %v1343
    %v1538 = vpack.c.b16 %v1346, %v1345
    %1731 = vmatprep.subr.bf16.mxu0 0
    %1732 = vmatpush1.bf16.msra.mxu0 %v1347
    %1733 = vmatprep.subr.bf16.mxu0 0
    %1734 = vmatpush1.bf16.msra.mxu0 %v1348
    %1735 = vmatprep.subr.bf16.mxu0 0
    %1736 = vmatpush1.bf16.msra.mxu0 %v1349
    %1737 = vmatprep.subr.bf16.mxu0 0
    %1738 = vmatpush1.bf16.msra.mxu0 %v1350
    %1739 = vmatprep.subr.bf16.mxu0 0
    %1740 = vmatpush1.bf16.msra.mxu0 %v1351
    %1741 = vmatprep.subr.bf16.mxu0 0
    %1742 = vmatpush1.bf16.msra.mxu0 %v1352
    %1743 = vmatprep.subr.bf16.mxu0 0
    %1744 = vmatpush1.bf16.msra.mxu0 %v1353
    %1745 = vmatprep.subr.bf16.mxu0 0
    %1746 = vmatpush1.bf16.msra.mxu0 %v1354
    %1747 = vmatprep.subr.bf16.mxu0 0
    %1748 = vmatpush1.bf16.msra.mxu0 %v1355
    %1749 = vmatprep.subr.bf16.mxu0 0
    %1750 = vmatpush1.bf16.msra.mxu0 %v1356
    %1751 = vmatprep.subr.bf16.mxu0 0
    %1752 = vmatpush1.bf16.msra.mxu0 %v1357
    %1753 = vmatprep.subr.bf16.mxu0 0
    %1754 = vmatpush1.bf16.msra.mxu0 %v1358
    %1755 = vmatprep.subr.bf16.mxu0 0
    %1756 = vmatpush1.bf16.msra.mxu0 %v1359
    %1757 = vmatprep.subr.bf16.mxu0 0
    %1758 = vmatpush1.bf16.msra.mxu0 %v1360
    %1759 = vmatprep.subr.bf16.mxu0 0
    %1760 = vmatpush1.bf16.msra.mxu0 %v1361
    %1761 = vmatprep.subr.bf16.mxu0 0
    %1762 = vmatpush1.bf16.msra.mxu0 %v1362
    %1763 = vmatprep.mubr.bf16.mxu0 %v532
    %1764 = vmatmul.mubr.bf16.gmra.mrb[0].mxu0 %v531
    %v1765 = vpop.f32.mrb[0].mxu0
    %v1766 = vadd.f32 %v457, %v1765
    %v1767 = vpop.f32.mrb[0].mxu0
    %v1768 = vpop.f32.mrb[0].mxu0
    %v1769 = vadd.f32 %v457, %v1768
    %v1770 = vpop.f32.mrb[0].mxu0
    %1771 = vdwg.mxu0
    %1772 = vmatprep.subr.bf16.mxu0 0
    %1773 = vmatpush1.bf16.msra.mxu0 %v1363
    %1774 = vmatprep.subr.bf16.mxu0 0
    %1775 = vmatpush1.bf16.msra.mxu0 %v1364
    %1776 = vmatprep.subr.bf16.mxu0 0
    %1777 = vmatpush1.bf16.msra.mxu0 %v1365
    %1778 = vmatprep.subr.bf16.mxu0 0
    %1779 = vmatpush1.bf16.msra.mxu0 %v1366
    %1780 = vmatprep.subr.bf16.mxu0 0
    %1781 = vmatpush1.bf16.msra.mxu0 %v1367
    %1782 = vmatprep.subr.bf16.mxu0 0
    %1783 = vmatpush1.bf16.msra.mxu0 %v1368
    %1784 = vmatprep.subr.bf16.mxu0 0
    %1785 = vmatpush1.bf16.msra.mxu0 %v1369
    %1786 = vmatprep.subr.bf16.mxu0 0
    %1787 = vmatpush1.bf16.msra.mxu0 %v1370
    %1788 = vmatprep.subr.bf16.mxu0 0
    %1789 = vmatpush1.bf16.msra.mxu0 %v1371
    %1790 = vmatprep.subr.bf16.mxu0 0
    %1791 = vmatpush1.bf16.msra.mxu0 %v1372
    %1792 = vmatprep.subr.bf16.mxu0 0
    %1793 = vmatpush1.bf16.msra.mxu0 %v1373
    %1794 = vmatprep.subr.bf16.mxu0 0
    %1795 = vmatpush1.bf16.msra.mxu0 %v1374
    %1796 = vmatprep.subr.bf16.mxu0 0
    %1797 = vmatpush1.bf16.msra.mxu0 %v1375
    %1798 = vmatprep.subr.bf16.mxu0 0
    %1799 = vmatpush1.bf16.msra.mxu0 %v1376
    %1800 = vmatprep.subr.bf16.mxu0 0
    %1801 = vmatpush1.bf16.msra.mxu0 %v1377
    %1802 = vmatprep.subr.bf16.mxu0 0
    %1803 = vmatpush1.bf16.msra.mxu0 %v1378
    %1804 = vmatprep.mubr.bf16.mxu0 %v534
    %1805 = vmatmul.mubr.bf16.gmra.mrb[0].mxu0 %v533
    %v1806 = vpop.f32.mrb[0].mxu0
    %v1807 = vadd.f32 %v1766, %v1806
    %v1808 = vpop.f32.mrb[0].mxu0
    %v1809 = vpop.f32.mrb[0].mxu0
    %v1810 = vadd.f32 %v1769, %v1809
    %v1811 = vpop.f32.mrb[0].mxu0
    %1812 = vdwg.mxu0
    %1813 = vmatprep.subr.bf16.mxu0 0
    %1814 = vmatpush1.bf16.msra.mxu0 %v1379
    %1815 = vmatprep.subr.bf16.mxu0 0
    %1816 = vmatpush1.bf16.msra.mxu0 %v1380
    %1817 = vmatprep.subr.bf16.mxu0 0
    %1818 = vmatpush1.bf16.msra.mxu0 %v1381
    %1819 = vmatprep.subr.bf16.mxu0 0
    %1820 = vmatpush1.bf16.msra.mxu0 %v1382
    %1821 = vmatprep.subr.bf16.mxu0 0
    %1822 = vmatpush1.bf16.msra.mxu0 %v1383
    %1823 = vmatprep.subr.bf16.mxu0 0
    %1824 = vmatpush1.bf16.msra.mxu0 %v1384
    %1825 = vmatprep.subr.bf16.mxu0 0
    %1826 = vmatpush1.bf16.msra.mxu0 %v1385
    %1827 = vmatprep.subr.bf16.mxu0 0
    %1828 = vmatpush1.bf16.msra.mxu0 %v1386
    %1829 = vmatprep.subr.bf16.mxu0 0
    %1830 = vmatpush1.bf16.msra.mxu0 %v1387
    %1831 = vmatprep.subr.bf16.mxu0 0
    %1832 = vmatpush1.bf16.msra.mxu0 %v1388
    %1833 = vmatprep.subr.bf16.mxu0 0
    %1834 = vmatpush1.bf16.msra.mxu0 %v1389
    %1835 = vmatprep.subr.bf16.mxu0 0
    %1836 = vmatpush1.bf16.msra.mxu0 %v1390
    %1837 = vmatprep.subr.bf16.mxu0 0
    %1838 = vmatpush1.bf16.msra.mxu0 %v1391
    %1839 = vmatprep.subr.bf16.mxu0 0
    %1840 = vmatpush1.bf16.msra.mxu0 %v1392
    %1841 = vmatprep.subr.bf16.mxu0 0
    %1842 = vmatpush1.bf16.msra.mxu0 %v1393
    %1843 = vmatprep.subr.bf16.mxu0 0
    %1844 = vmatpush1.bf16.msra.mxu0 %v1394
    %1845 = vmatprep.mubr.bf16.mxu0 %v536
    %1846 = vmatmul.mubr.bf16.gmra.mrb[0].mxu0 %v535
    %v1847 = vpop.f32.mrb[0].mxu0
    %v1848 = vadd.f32 %v1807, %v1847
    %v1849 = vpop.f32.mrb[0].mxu0
    %v1850 = vpop.f32.mrb[0].mxu0
    %v1851 = vadd.f32 %v1810, %v1850
    %v1852 = vpop.f32.mrb[0].mxu0
    %1853 = vdwg.mxu0
    %1854 = vmatprep.subr.bf16.mxu0 0
    %1855 = vmatpush1.bf16.msra.mxu0 %v1395
    %1856 = vmatprep.subr.bf16.mxu0 0
    %1857 = vmatpush1.bf16.msra.mxu0 %v1396
    %1858 = vmatprep.subr.bf16.mxu0 0
    %1859 = vmatpush1.bf16.msra.mxu0 %v1397
    %1860 = vmatprep.subr.bf16.mxu0 0
    %1861 = vmatpush1.bf16.msra.mxu0 %v1398
    %1862 = vmatprep.subr.bf16.mxu0 0
    %1863 = vmatpush1.bf16.msra.mxu0 %v1399
    %1864 = vmatprep.subr.bf16.mxu0 0
    %1865 = vmatpush1.bf16.msra.mxu0 %v1400
    %1866 = vmatprep.subr.bf16.mxu0 0
    %1867 = vmatpush1.bf16.msra.mxu0 %v1401
    %1868 = vmatprep.subr.bf16.mxu0 0
    %1869 = vmatpush1.bf16.msra.mxu0 %v1402
    %1870 = vmatprep.subr.bf16.mxu0 0
    %1871 = vmatpush1.bf16.msra.mxu0 %v1403
    %1872 = vmatprep.subr.bf16.mxu0 0
    %1873 = vmatpush1.bf16.msra.mxu0 %v1404
    %1874 = vmatprep.subr.bf16.mxu0 0
    %1875 = vmatpush1.bf16.msra.mxu0 %v1405
    %1876 = vmatprep.subr.bf16.mxu0 0
    %1877 = vmatpush1.bf16.msra.mxu0 %v1406
    %1878 = vmatprep.subr.bf16.mxu0 0
    %1879 = vmatpush1.bf16.msra.mxu0 %v1407
    %1880 = vmatprep.subr.bf16.mxu0 0
    %1881 = vmatpush1.bf16.msra.mxu0 %v1408
    %1882 = vmatprep.subr.bf16.mxu0 0
    %1883 = vmatpush1.bf16.msra.mxu0 %v1409
    %1884 = vmatprep.subr.bf16.mxu0 0
    %1885 = vmatpush1.bf16.msra.mxu0 %v1410
    %1886 = vmatprep.mubr.bf16.mxu0 %v538
    %1887 = vmatmul.mubr.bf16.gmra.mrb[0].mxu0 %v537
    %v1888 = vpop.f32.mrb[0].mxu0
    %v1889 = vadd.f32 %v1848, %v1888
    %v1890 = vpop.f32.mrb[0].mxu0
    %v1891 = vpop.f32.mrb[0].mxu0
    %v1892 = vadd.f32 %v1851, %v1891
    %v1893 = vpop.f32.mrb[0].mxu0
    %1894 = vdwg.mxu0
    %1895 = vmatprep.subr.bf16.mxu0 0
    %1896 = vmatpush1.bf16.msra.mxu0 %v1411
    %1897 = vmatprep.subr.bf16.mxu0 0
    %1898 = vmatpush1.bf16.msra.mxu0 %v1412
    %1899 = vmatprep.subr.bf16.mxu0 0
    %1900 = vmatpush1.bf16.msra.mxu0 %v1413
    %1901 = vmatprep.subr.bf16.mxu0 0
    %1902 = vmatpush1.bf16.msra.mxu0 %v1414
    %1903 = vmatprep.subr.bf16.mxu0 0
    %1904 = vmatpush1.bf16.msra.mxu0 %v1415
    %1905 = vmatprep.subr.bf16.mxu0 0
    %1906 = vmatpush1.bf16.msra.mxu0 %v1416
    %1907 = vmatprep.subr.bf16.mxu0 0
    %1908 = vmatpush1.bf16.msra.mxu0 %v1417
    %1909 = vmatprep.subr.bf16.mxu0 0
    %1910 = vmatpush1.bf16.msra.mxu0 %v1418
    %1911 = vmatprep.subr.bf16.mxu0 0
    %1912 = vmatpush1.bf16.msra.mxu0 %v1419
    %1913 = vmatprep.subr.bf16.mxu0 0
    %1914 = vmatpush1.bf16.msra.mxu0 %v1420
    %1915 = vmatprep.subr.bf16.mxu0 0
    %1916 = vmatpush1.bf16.msra.mxu0 %v1421
    %1917 = vmatprep.subr.bf16.mxu0 0
    %1918 = vmatpush1.bf16.msra.mxu0 %v1422
    %1919 = vmatprep.subr.bf16.mxu0 0
    %1920 = vmatpush1.bf16.msra.mxu0 %v1423
    %1921 = vmatprep.subr.bf16.mxu0 0
    %1922 = vmatpush1.bf16.msra.mxu0 %v1424
    %1923 = vmatprep.subr.bf16.mxu0 0
    %1924 = vmatpush1.bf16.msra.mxu0 %v1425
    %1925 = vmatprep.subr.bf16.mxu0 0
    %1926 = vmatpush1.bf16.msra.mxu0 %v1426
    %1927 = vmatprep.mubr.bf16.mxu0 %v540
    %1928 = vmatmul.mubr.bf16.gmra.mrb[0].mxu0 %v539
    %v1929 = vpop.f32.mrb[0].mxu0
    %v1930 = vadd.f32 %v1889, %v1929
    %v1931 = vpop.f32.mrb[0].mxu0
    %v1932 = vpop.f32.mrb[0].mxu0
    %v1933 = vadd.f32 %v1892, %v1932
    %v1934 = vpop.f32.mrb[0].mxu0
    %1935 = vdwg.mxu0
    %1936 = vmatprep.subr.bf16.mxu0 0
    %1937 = vmatpush1.bf16.msra.mxu0 %v1427
    %1938 = vmatprep.subr.bf16.mxu0 0
    %1939 = vmatpush1.bf16.msra.mxu0 %v1428
    %1940 = vmatprep.subr.bf16.mxu0 0
    %1941 = vmatpush1.bf16.msra.mxu0 %v1429
    %1942 = vmatprep.subr.bf16.mxu0 0
    %1943 = vmatpush1.bf16.msra.mxu0 %v1430
    %1944 = vmatprep.subr.bf16.mxu0 0
    %1945 = vmatpush1.bf16.msra.mxu0 %v1431
    %1946 = vmatprep.subr.bf16.mxu0 0
    %1947 = vmatpush1.bf16.msra.mxu0 %v1432
    %1948 = vmatprep.subr.bf16.mxu0 0
    %1949 = vmatpush1.bf16.msra.mxu0 %v1433
    %1950 = vmatprep.subr.bf16.mxu0 0
    %1951 = vmatpush1.bf16.msra.mxu0 %v1434
    %1952 = vmatprep.subr.bf16.mxu0 0
    %1953 = vmatpush1.bf16.msra.mxu0 %v1435
    %1954 = vmatprep.subr.bf16.mxu0 0
    %1955 = vmatpush1.bf16.msra.mxu0 %v1436
    %1956 = vmatprep.subr.bf16.mxu0 0
    %1957 = vmatpush1.bf16.msra.mxu0 %v1437
    %1958 = vmatprep.subr.bf16.mxu0 0
    %1959 = vmatpush1.bf16.msra.mxu0 %v1438
    %1960 = vmatprep.subr.bf16.mxu0 0
    %1961 = vmatpush1.bf16.msra.mxu0 %v1439
    %1962 = vmatprep.subr.bf16.mxu0 0
    %1963 = vmatpush1.bf16.msra.mxu0 %v1440
    %1964 = vmatprep.subr.bf16.mxu0 0
    %1965 = vmatpush1.bf16.msra.mxu0 %v1441
    %1966 = vmatprep.subr.bf16.mxu0 0
    %1967 = vmatpush1.bf16.msra.mxu0 %v1442
    %1968 = vmatprep.mubr.bf16.mxu0 %v542
    %1969 = vmatmul.mubr.bf16.gmra.mrb[0].mxu0 %v541
    %v1970 = vpop.f32.mrb[0].mxu0
    %v1971 = vadd.f32 %v1930, %v1970
    %v1972 = vpop.f32.mrb[0].mxu0
    %v1973 = vpop.f32.mrb[0].mxu0
    %v1974 = vadd.f32 %v1933, %v1973
    %v1975 = vpop.f32.mrb[0].mxu0
    %1976 = vdwg.mxu0
    %1977 = vmatprep.subr.bf16.mxu0 0
    %1978 = vmatpush1.bf16.msra.mxu0 %v1443
    %1979 = vmatprep.subr.bf16.mxu0 0
    %1980 = vmatpush1.bf16.msra.mxu0 %v1444
    %1981 = vmatprep.subr.bf16.mxu0 0
    %1982 = vmatpush1.bf16.msra.mxu0 %v1445
    %1983 = vmatprep.subr.bf16.mxu0 0
    %1984 = vmatpush1.bf16.msra.mxu0 %v1446
    %1985 = vmatprep.subr.bf16.mxu0 0
    %1986 = vmatpush1.bf16.msra.mxu0 %v1447
    %1987 = vmatprep.subr.bf16.mxu0 0
    %1988 = vmatpush1.bf16.msra.mxu0 %v1448
    %1989 = vmatprep.subr.bf16.mxu0 0
    %1990 = vmatpush1.bf16.msra.mxu0 %v1449
    %1991 = vmatprep.subr.bf16.mxu0 0
    %1992 = vmatpush1.bf16.msra.mxu0 %v1450
    %1993 = vmatprep.subr.bf16.mxu0 0
    %1994 = vmatpush1.bf16.msra.mxu0 %v1451
    %1995 = vmatprep.subr.bf16.mxu0 0
    %1996 = vmatpush1.bf16.msra.mxu0 %v1452
    %1997 = vmatprep.subr.bf16.mxu0 0
    %1998 = vmatpush1.bf16.msra.mxu0 %v1453
    %1999 = vmatprep.subr.bf16.mxu0 0
    %2000 = vmatpush1.bf16.msra.mxu0 %v1454
    %2001 = vmatprep.subr.bf16.mxu0 0
    %2002 = vmatpush1.bf16.msra.mxu0 %v1455
    %2003 = vmatprep.subr.bf16.mxu0 0
    %2004 = vmatpush1.bf16.msra.mxu0 %v1456
    %2005 = vmatprep.subr.bf16.mxu0 0
    %2006 = vmatpush1.bf16.msra.mxu0 %v1457
    %2007 = vmatprep.subr.bf16.mxu0 0
    %2008 = vmatpush1.bf16.msra.mxu0 %v1458
    %2009 = vmatprep.mubr.bf16.mxu0 %v544
    %2010 = vmatmul.mubr.bf16.gmra.mrb[0].mxu0 %v543
    %v2011 = vpop.f32.mrb[0].mxu0
    %v2012 = vadd.f32 %v1971, %v2011
    %v2013 = vpop.f32.mrb[0].mxu0
    %v2014 = vpop.f32.mrb[0].mxu0
    %v2015 = vadd.f32 %v1974, %v2014
    %v2016 = vpop.f32.mrb[0].mxu0
    %2017 = vdwg.mxu0
    %2018 = vmatprep.subr.bf16.mxu0 0
    %2019 = vmatpush1.bf16.msra.mxu0 %v1459
    %2020 = vmatprep.subr.bf16.mxu0 0
    %2021 = vmatpush1.bf16.msra.mxu0 %v1460
    %2022 = vmatprep.subr.bf16.mxu0 0
    %2023 = vmatpush1.bf16.msra.mxu0 %v1461
    %2024 = vmatprep.subr.bf16.mxu0 0
    %2025 = vmatpush1.bf16.msra.mxu0 %v1462
    %2026 = vmatprep.subr.bf16.mxu0 0
    %2027 = vmatpush1.bf16.msra.mxu0 %v1463
    %2028 = vmatprep.subr.bf16.mxu0 0
    %2029 = vmatpush1.bf16.msra.mxu0 %v1464
    %2030 = vmatprep.subr.bf16.mxu0 0
    %2031 = vmatpush1.bf16.msra.mxu0 %v1465
    %2032 = vmatprep.subr.bf16.mxu0 0
    %2033 = vmatpush1.bf16.msra.mxu0 %v1466
    %2034 = vmatprep.subr.bf16.mxu0 0
    %2035 = vmatpush1.bf16.msra.mxu0 %v1467
    %2036 = vmatprep.subr.bf16.mxu0 0
    %2037 = vmatpush1.bf16.msra.mxu0 %v1468
    %2038 = vmatprep.subr.bf16.mxu0 0
    %2039 = vmatpush1.bf16.msra.mxu0 %v1469
    %2040 = vmatprep.subr.bf16.mxu0 0
    %2041 = vmatpush1.bf16.msra.mxu0 %v1470
    %2042 = vmatprep.subr.bf16.mxu0 0
    %2043 = vmatpush1.bf16.msra.mxu0 %v1471
    %2044 = vmatprep.subr.bf16.mxu0 0
    %2045 = vmatpush1.bf16.msra.mxu0 %v1472
    %2046 = vmatprep.subr.bf16.mxu0 0
    %2047 = vmatpush1.bf16.msra.mxu0 %v1473
    %2048 = vmatprep.subr.bf16.mxu0 0
    %2049 = vmatpush1.bf16.msra.mxu0 %v1474
    %2050 = vmatprep.mubr.bf16.mxu0 %v546
    %2051 = vmatmul.mubr.bf16.gmra.mrb[0].mxu0 %v545
    %v2052 = vpop.f32.mrb[0].mxu0
    %v2053 = vadd.f32 %v2012, %v2052
    %v2054 = vpop.f32.mrb[0].mxu0
    %v2055 = vpop.f32.mrb[0].mxu0
    %v2056 = vadd.f32 %v2015, %v2055
    %v2057 = vpop.f32.mrb[0].mxu0
    %2058 = vdwg.mxu0
    %2059 = vmatprep.subr.bf16.mxu0 0
    %2060 = vmatpush1.bf16.msra.mxu0 %v1475
    %2061 = vmatprep.subr.bf16.mxu0 0
    %2062 = vmatpush1.bf16.msra.mxu0 %v1476
    %2063 = vmatprep.subr.bf16.mxu0 0
    %2064 = vmatpush1.bf16.msra.mxu0 %v1477
    %2065 = vmatprep.subr.bf16.mxu0 0
    %2066 = vmatpush1.bf16.msra.mxu0 %v1478
    %2067 = vmatprep.subr.bf16.mxu0 0
    %2068 = vmatpush1.bf16.msra.mxu0 %v1479
    %2069 = vmatprep.subr.bf16.mxu0 0
    %2070 = vmatpush1.bf16.msra.mxu0 %v1480
    %2071 = vmatprep.subr.bf16.mxu0 0
    %2072 = vmatpush1.bf16.msra.mxu0 %v1481
    %2073 = vmatprep.subr.bf16.mxu0 0
    %2074 = vmatpush1.bf16.msra.mxu0 %v1482
    %2075 = vmatprep.subr.bf16.mxu0 0
    %2076 = vmatpush1.bf16.msra.mxu0 %v1483
    %2077 = vmatprep.subr.bf16.mxu0 0
    %2078 = vmatpush1.bf16.msra.mxu0 %v1484
    %2079 = vmatprep.subr.bf16.mxu0 0
    %2080 = vmatpush1.bf16.msra.mxu0 %v1485
    %2081 = vmatprep.subr.bf16.mxu0 0
    %2082 = vmatpush1.bf16.msra.mxu0 %v1486
    %2083 = vmatprep.subr.bf16.mxu0 0
    %2084 = vmatpush1.bf16.msra.mxu0 %v1487
    %2085 = vmatprep.subr.bf16.mxu0 0
    %2086 = vmatpush1.bf16.msra.mxu0 %v1488
    %2087 = vmatprep.subr.bf16.mxu0 0
    %2088 = vmatpush1.bf16.msra.mxu0 %v1489
    %2089 = vmatprep.subr.bf16.mxu0 0
    %2090 = vmatpush1.bf16.msra.mxu0 %v1490
    %2091 = vmatprep.mubr.bf16.mxu0 %v548
    %2092 = vmatmul.mubr.bf16.gmra.mrb[0].mxu0 %v547
    %v2093 = vpop.f32.mrb[0].mxu0
    %v2094 = vadd.f32 %v2053, %v2093
    %v2095 = vpop.f32.mrb[0].mxu0
    %v2096 = vpop.f32.mrb[0].mxu0
    %v2097 = vadd.f32 %v2056, %v2096
    %v2098 = vpop.f32.mrb[0].mxu0
    %2099 = vdwg.mxu0
    %2100 = vmatprep.subr.bf16.mxu0 0
    %2101 = vmatpush1.bf16.msra.mxu0 %v1491
    %2102 = vmatprep.subr.bf16.mxu0 0
    %2103 = vmatpush1.bf16.msra.mxu0 %v1492
    %2104 = vmatprep.subr.bf16.mxu0 0
    %2105 = vmatpush1.bf16.msra.mxu0 %v1493
    %2106 = vmatprep.subr.bf16.mxu0 0
    %2107 = vmatpush1.bf16.msra.mxu0 %v1494
    %2108 = vmatprep.subr.bf16.mxu0 0
    %2109 = vmatpush1.bf16.msra.mxu0 %v1495
    %2110 = vmatprep.subr.bf16.mxu0 0
    %2111 = vmatpush1.bf16.msra.mxu0 %v1496
    %2112 = vmatprep.subr.bf16.mxu0 0
    %2113 = vmatpush1.bf16.msra.mxu0 %v1497
    %2114 = vmatprep.subr.bf16.mxu0 0
    %2115 = vmatpush1.bf16.msra.mxu0 %v1498
    %2116 = vmatprep.subr.bf16.mxu0 0
    %2117 = vmatpush1.bf16.msra.mxu0 %v1499
    %2118 = vmatprep.subr.bf16.mxu0 0
    %2119 = vmatpush1.bf16.msra.mxu0 %v1500
    %2120 = vmatprep.subr.bf16.mxu0 0
    %2121 = vmatpush1.bf16.msra.mxu0 %v1501
    %2122 = vmatprep.subr.bf16.mxu0 0
    %2123 = vmatpush1.bf16.msra.mxu0 %v1502
    %2124 = vmatprep.subr.bf16.mxu0 0
    %2125 = vmatpush1.bf16.msra.mxu0 %v1503
    %2126 = vmatprep.subr.bf16.mxu0 0
    %2127 = vmatpush1.bf16.msra.mxu0 %v1504
    %2128 = vmatprep.subr.bf16.mxu0 0
    %2129 = vmatpush1.bf16.msra.mxu0 %v1505
    %2130 = vmatprep.subr.bf16.mxu0 0
    %2131 = vmatpush1.bf16.msra.mxu0 %v1506
    %2132 = vmatprep.mubr.bf16.mxu0 %v550
    %2133 = vmatmul.mubr.bf16.gmra.mrb[0].mxu0 %v549
    %v2134 = vpop.f32.mrb[0].mxu0
    %v2135 = vadd.f32 %v2094, %v2134
    %v2136 = vpop.f32.mrb[0].mxu0
    %v2137 = vpop.f32.mrb[0].mxu0
    %v2138 = vadd.f32 %v2097, %v2137
    %v2139 = vpop.f32.mrb[0].mxu0
    %2140 = vdwg.mxu0
    %2141 = vmatprep.subr.bf16.mxu0 0
    %2142 = vmatpush1.bf16.msra.mxu0 %v1507
    %2143 = vmatprep.subr.bf16.mxu0 0
    %2144 = vmatpush1.bf16.msra.mxu0 %v1508
    %2145 = vmatprep.subr.bf16.mxu0 0
    %2146 = vmatpush1.bf16.msra.mxu0 %v1509
    %2147 = vmatprep.subr.bf16.mxu0 0
    %2148 = vmatpush1.bf16.msra.mxu0 %v1510
    %2149 = vmatprep.subr.bf16.mxu0 0
    %2150 = vmatpush1.bf16.msra.mxu0 %v1511
    %2151 = vmatprep.subr.bf16.mxu0 0
    %2152 = vmatpush1.bf16.msra.mxu0 %v1512
    %2153 = vmatprep.subr.bf16.mxu0 0
    %2154 = vmatpush1.bf16.msra.mxu0 %v1513
    %2155 = vmatprep.subr.bf16.mxu0 0
    %2156 = vmatpush1.bf16.msra.mxu0 %v1514
    %2157 = vmatprep.subr.bf16.mxu0 0
    %2158 = vmatpush1.bf16.msra.mxu0 %v1515
    %2159 = vmatprep.subr.bf16.mxu0 0
    %2160 = vmatpush1.bf16.msra.mxu0 %v1516
    %2161 = vmatprep.subr.bf16.mxu0 0
    %2162 = vmatpush1.bf16.msra.mxu0 %v1517
    %2163 = vmatprep.subr.bf16.mxu0 0
    %2164 = vmatpush1.bf16.msra.mxu0 %v1518
    %2165 = vmatprep.subr.bf16.mxu0 0
    %2166 = vmatpush1.bf16.msra.mxu0 %v1519
    %2167 = vmatprep.subr.bf16.mxu0 0
    %2168 = vmatpush1.bf16.msra.mxu0 %v1520
    %2169 = vmatprep.subr.bf16.mxu0 0
    %2170 = vmatpush1.bf16.msra.mxu0 %v1521
    %2171 = vmatprep.subr.bf16.mxu0 0
    %2172 = vmatpush1.bf16.msra.mxu0 %v1522
    %2173 = vmatprep.mubr.bf16.mxu0 %v552
    %2174 = vmatmul.mubr.bf16.gmra.mrb[0].mxu0 %v551
    %v2175 = vpop.f32.mrb[0].mxu0
    %v2176 = vadd.f32 %v2135, %v2175
    %v2177 = vpop.f32.mrb[0].mxu0
    %v2178 = vpop.f32.mrb[0].mxu0
    %v2179 = vadd.f32 %v2138, %v2178
    %v2180 = vpop.f32.mrb[0].mxu0
    %2181 = vdwg.mxu0
    %2182 = vmatprep.subr.bf16.mxu0 0
    %2183 = vmatpush1.bf16.msra.mxu0 %v1523
    %2184 = vmatprep.subr.bf16.mxu0 0
    %2185 = vmatpush1.bf16.msra.mxu0 %v1524
    %2186 = vmatprep.subr.bf16.mxu0 0
    %2187 = vmatpush1.bf16.msra.mxu0 %v1525
    %2188 = vmatprep.subr.bf16.mxu0 0
    %2189 = vmatpush1.bf16.msra.mxu0 %v1526
    %2190 = vmatprep.subr.bf16.mxu0 0
    %2191 = vmatpush1.bf16.msra.mxu0 %v1527
    %2192 = vmatprep.subr.bf16.mxu0 0
    %2193 = vmatpush1.bf16.msra.mxu0 %v1528
    %2194 = vmatprep.subr.bf16.mxu0 0
    %2195 = vmatpush1.bf16.msra.mxu0 %v1529
    %2196 = vmatprep.subr.bf16.mxu0 0
    %2197 = vmatpush1.bf16.msra.mxu0 %v1530
    %2198 = vmatprep.subr.bf16.mxu0 0
    %2199 = vmatpush1.bf16.msra.mxu0 %v1531
    %2200 = vmatprep.subr.bf16.mxu0 0
    %2201 = vmatpush1.bf16.msra.mxu0 %v1532
    %2202 = vmatprep.subr.bf16.mxu0 0
    %2203 = vmatpush1.bf16.msra.mxu0 %v1533
    %2204 = vmatprep.subr.bf16.mxu0 0
    %2205 = vmatpush1.bf16.msra.mxu0 %v1534
    %2206 = vmatprep.subr.bf16.mxu0 0
    %2207 = vmatpush1.bf16.msra.mxu0 %v1535
    %2208 = vmatprep.subr.bf16.mxu0 0
    %2209 = vmatpush1.bf16.msra.mxu0 %v1536
    %2210 = vmatprep.subr.bf16.mxu0 0
    %2211 = vmatpush1.bf16.msra.mxu0 %v1537
    %2212 = vmatprep.subr.bf16.mxu0 0
    %2213 = vmatpush1.bf16.msra.mxu0 %v1538
    %2214 = vmatprep.mubr.bf16.mxu0 %v554
    %2215 = vmatmul.mubr.bf16.gmra.mrb[0].mxu0 %v553
    %v2216 = vpop.f32.mrb[0].mxu0
    %v2217 = vadd.f32 %v2176, %v2216
    %v2218 = vpop.f32.mrb[0].mxu0
    %v2219 = vpop.f32.mrb[0].mxu0
    %v2220 = vadd.f32 %v2179, %v2219
    %v2221 = vpop.f32.mrb[0].mxu0
    %2222 = vdwg.mxu0
    %2223 = vst [vmem:[#allocation7] sm:$0xff] %v2217
    %2224 = vst [vmem:[#allocation7 + $0x8] sm:$0xff] %v2220
    // Predicated region
    $region22: #{tpu_custom_call.1} parent=1 // pred_check
      _
    $region23: #{tpu_custom_call.1} parent=1 // pred_check_branch
      %2226 = sbr.rel (0) target = $region25
    $region24: #{tpu_custom_call.1} parent=1 // pred_region
      %s2228 = ssub.s32 256, 256
      %2229 = vsyncadd [#allocation4], %s2228
      %s2230 = sshll.u32 [#allocation7], 4
      %s2231 = int_to_ptr.vmem [resolvable:$true] %s2230
      %2236 = dma.vmem_to_hbm [thread:$0]  %s2231, 256, %s3, [#allocation4], 128, 128, 8
    $region25: #{tpu_custom_call.1} parent=1 // pred_fallthru
      _
    // Predicated region
    $region26: #{tpu_custom_call.1} parent=1 // pred_check
      _
    $region27: #{tpu_custom_call.1} parent=1 // pred_check_branch
      %2238 = sbr.rel (0) target = $region29
    $region28: #{tpu_custom_call.1} parent=1 // pred_region
      %2239 = dma.done [#allocation4], 256
    $region29: #{tpu_custom_call.1} parent=1 // pred_fallthru
      _
    %2240 = vsyncpa [#allocation3], 1
    %2241 = vsyncpa [#allocation6], 1
    %2242 = vsyncpa [#allocation4], 1

</llo_original>
